<compile_context>
chip_gen: v7x
topology: tpu7x:2x2x1
jax: 0.10.0
libtpu: 0.0.40
codegen_flags: <defaults>
</compile_context>

<pallas_src>
import math
import functools

import jax
import jax.numpy as jnp
from jax.experimental import pallas as pl
from jax.experimental.pallas import tpu as pltpu


def mh_pooling_kernel(x_ref, wq_ref, wk_ref, wv_ref, wo_ref,
                      bq_ref, bk_ref, bv_ref, bo_ref,
                      o_ref, acc_ref, *, tq, d_k):
    """One grid step = (batch b, query tile qi, head hd).

    x_ref : (S, D)   bf16   full sequence for batch b (re-DMA'd only when b changes)
    wq/wk/wv_ref : (D, d_k) bf16   this head's projection columns
    wo_ref : (d_k, D) bf16   this head's output-projection rows
    bq/bk/bv_ref : (1, d_k) f32,  bo_ref : (1, D) f32
    o_ref  : (tq, D)  output block for (b, qi)
    acc_ref: (tq, D)  f32 accumulator over heads
    """
    qi = pl.program_id(1)
    hd = pl.program_id(2)
    nh = pl.num_programs(2)

    @pl.when(hd == 0)
    def _init():
        acc_ref[...] = jnp.zeros_like(acc_ref)

    x_kv = x_ref[...]                                   # (S, D) bf16
    seq_len = x_kv.shape[0]
    q_start = pl.multiple_of(qi * tq, tq)
    x_q = x_ref[pl.ds(q_start, tq), :]                  # (tq, D) bf16

    scale = jnp.float32(1.0 / math.sqrt(d_k))

    # Per-head projections: bf16 MXU inputs, f32 accumulate, full-D contraction.
    qh = (jnp.dot(x_q, wq_ref[...], preferred_element_type=jnp.float32)
          + bq_ref[...]) * scale                        # (tq, d_k) f32, scale folded into q
    kh = jnp.dot(x_kv, wk_ref[...], preferred_element_type=jnp.float32) + bk_ref[...]
    vh = jnp.dot(x_kv, wv_ref[...], preferred_element_type=jnp.float32) + bv_ref[...]

    # Scores for this q tile vs all keys (q @ k^T), f32 result.
    s = jax.lax.dot_general(qh.astype(jnp.bfloat16), kh.astype(jnp.bfloat16),
                            (((1,), (1,)), ((), ())),
                            preferred_element_type=jnp.float32)   # (tq, S)

    # Causal mask (matches the PyTorch triu buffer / -1e9 fill); applied in f32
    # before the row max, so no bf16 separation issues.
    row = jax.lax.broadcasted_iota(jnp.int32, (tq, seq_len), 0) + q_start
    col = jax.lax.broadcasted_iota(jnp.int32, (tq, seq_len), 1)
    s = jnp.where(col <= row, s, jnp.float32(-1e9))

    # Numerically stable softmax, all f32; reciprocal on the EUP slot.
    m = jnp.max(s, axis=-1, keepdims=True)
    p = jnp.exp(s - m)
    denom = jnp.sum(p, axis=-1, keepdims=True)
    p = p * pl.reciprocal(denom, approx=True)
    # TODO(synk): dropout(p=0.1) on p would go here in training mode (eval: identity).

    # Context for this head, then accumulate its slice of the output projection:
    # acc += (p @ v_h) @ wo[h*d_k:(h+1)*d_k, :]
    ctx = jnp.dot(p.astype(jnp.bfloat16), vh.astype(jnp.bfloat16),
                  preferred_element_type=jnp.float32)             # (tq, d_k)
    acc_ref[...] += jnp.dot(ctx.astype(jnp.bfloat16), wo_ref[...],
                            preferred_element_type=jnp.float32)   # (tq, D)

    @pl.when(hd == nh - 1)
    def _finalize():
        o_ref[...] = (acc_ref[...] + bo_ref[...]).astype(o_ref.dtype)


def mh_pooling(x, params, h, *, tq=None):
    B, S, D = x.shape
    assert D % h == 0
    d_k = D // h
    if tq is None:
        tq = min(S, 128)
    assert S % tq == 0
    n_q = S // tq
    wq, wk, wv, wo, bq, bk, bv, bo = params

    cdt = jnp.bfloat16  # MXU input dtype (halves weight DMA/VMEM vs f32)

    # Wrapper-side layout plumbing (free): split weights/biases per head so the
    # kernel never slices sub-128-lane columns or concatenates head outputs.
    def split_w_in(w):   # (D, D) -> (h, D, d_k): this head's output columns
        return w.reshape(D, h, d_k).transpose(1, 0, 2).astype(cdt)

    def split_b(b):      # (1, D) -> (h, 1, d_k), kept f32
        return b.reshape(1, h, d_k).transpose(1, 0, 2)

    wo_h = wo.reshape(h, d_k, D).astype(cdt)             # this head's input rows
    x_c = x.astype(cdt)

    kernel = functools.partial(mh_pooling_kernel, tq=tq, d_k=d_k)

    w_in_spec = pl.BlockSpec((None, D, d_k), lambda b, qi, hd: (hd, 0, 0))
    b_in_spec = pl.BlockSpec((None, 1, d_k), lambda b, qi, hd: (hd, 0, 0))

    return pl.pallas_call(
        kernel,
        out_shape=jax.ShapeDtypeStruct((B, S, D), x.dtype),
        grid=(B, n_q, h),
        in_specs=[
            pl.BlockSpec((None, S, D), lambda b, qi, hd: (b, 0, 0)),    # x (full seq, per batch)
            w_in_spec, w_in_spec, w_in_spec,                             # Wq, Wk, Wv per-head cols
            pl.BlockSpec((None, d_k, D), lambda b, qi, hd: (hd, 0, 0)),  # Wo per-head rows
            b_in_spec, b_in_spec, b_in_spec,                             # bq, bk, bv per-head
            pl.BlockSpec((1, D), lambda b, qi, hd: (0, 0)),              # bo
        ],
        out_specs=pl.BlockSpec((None, tq, D), lambda b, qi, hd: (b, qi, 0)),
        scratch_shapes=[pltpu.VMEM((tq, D), jnp.float32)],
        compiler_params=pltpu.CompilerParams(
            # batch and q-tiles are independent (megacore-parallel, keeps both v7x
            # TCs busy); heads is the output-projection reduction axis.
            dimension_semantics=("parallel", "parallel", "arbitrary"),
            # Explicit VMEM budget (v7x has 64 MiB physical / 32 MiB scoped default).
            vmem_limit_bytes=64 * 1024 * 1024,
        ),
    )(x_c, split_w_in(wq), split_w_in(wk), split_w_in(wv), wo_h,
      split_b(bq), split_b(bk), split_b(bv), bo)


def mh_pooling_reference(x, params, h):
    """Pure-JAX f32 reference mirroring the PyTorch forward (eval-mode dropout)."""
    wq, wk, wv, wo, bq, bk, bv, bo = params
    B, S, D = x.shape
    d_k = D // h

    def split_heads(t):
        return t.reshape(B, S, h, d_k).transpose(0, 2, 1, 3)   # (B, h, S, d_k)

    q = split_heads(x @ wq + bq)
    k = split_heads(x @ wk + bk)
    v = split_heads(x @ wv + bv)

    scores = jnp.einsum("bhqd,bhkd->bhqk", q, k) / math.sqrt(d_k)
    causal = jnp.tril(jnp.ones((S, S), dtype=bool))
    scores = jnp.where(causal[None, None], scores, -1e9)
    p = jax.nn.softmax(scores, axis=-1)
    out = jnp.einsum("bhqk,bhkd->bhqd", p, v)
    out = out.transpose(0, 2, 1, 3).reshape(B, S, D)
    return out @ wo + bo


def init_params(key, d_model):
    # PyTorch-Linear-style uniform init: U(-1/sqrt(in), 1/sqrt(in)).
    # Weights are stored pre-transposed to (in_features, out_features): y = x @ W + b.
    bound = 1.0 / math.sqrt(d_model)
    keys = jax.random.split(key, 8)
    ws = [jax.random.uniform(keys[i], (d_model, d_model), jnp.float32,
                             minval=-bound, maxval=bound) for i in range(4)]
    bs = [jax.random.uniform(keys[4 + i], (1, d_model), jnp.float32,
                             minval=-bound, maxval=bound) for i in range(4)]
    return tuple(ws + bs)


if __name__ == "__main__":
    # Small but lane/sublane-aligned demo shapes: D multiple of 128, S multiple of 16.
    B, S, D, H = 2, 32, 128, 4   # batch, seq_len, d_model, n_heads (d_k = 32)

    root = jax.random.PRNGKey(0)
    kx, kp = jax.random.split(root)
    x = jax.random.normal(kx, (B, S, D), dtype=jnp.float32)
    params = init_params(kp, D)

    out = mh_pooling(x, params, H, tq=16)
    out = jax.block_until_ready(out)

    ref = mh_pooling_reference(x, params, H)
    assert out.shape == (B, S, D)
    max_err = float(jnp.max(jnp.abs(out - ref)))
    # bf16 MXU inputs (f32 accumulate/softmax) vs a pure-f32 reference -> loose tolerance.
    assert jnp.allclose(out, ref, atol=3e-2, rtol=3e-2), f"Pallas mismatch, max_err={max_err}"

    print("KERNEL_OK")
</pallas_src>

<mosaic_0001>
module attributes {stable_mosaic.version = 11 : i64} {
  func.func @mh_pooling_kernel(%arg0: i32, %arg1: i32, %arg2: i32, %arg3: memref<1x32x128xbf16, #tpu.memory_space<vmem>>, %arg4: memref<1x128x32xbf16, #tpu.memory_space<vmem>>, %arg5: memref<1x128x32xbf16, #tpu.memory_space<vmem>>, %arg6: memref<1x128x32xbf16, #tpu.memory_space<vmem>>, %arg7: memref<1x32x128xbf16, #tpu.memory_space<vmem>>, %arg8: memref<1x1x32xf32, #tpu.memory_space<vmem>>, %arg9: memref<1x1x32xf32, #tpu.memory_space<vmem>>, %arg10: memref<1x1x32xf32, #tpu.memory_space<vmem>>, %arg11: memref<1x128xf32, #tpu.memory_space<vmem>>, %arg12: memref<1x16x128xf32, #tpu.memory_space<vmem>>, %arg13: memref<16x128xf32, #tpu.memory_space<vmem>>) attributes {dimension_semantics = [#tpu.dimension_semantics<parallel>, #tpu.dimension_semantics<parallel>, #tpu.dimension_semantics<arbitrary>], iteration_bounds = array<i64: 2, 2, 4>, scalar_prefetch = 0 : i64, scratch_operands = 1 : i64, tpu.core_type = #tpu.core_type<tc>, window_params = [{transform_indices = @transform_0, window_bounds = array<i64: 1, 32, 128>}, {transform_indices = @transform_1, window_bounds = array<i64: 1, 128, 32>}, {transform_indices = @transform_2, window_bounds = array<i64: 1, 128, 32>}, {transform_indices = @transform_3, window_bounds = array<i64: 1, 128, 32>}, {transform_indices = @transform_4, window_bounds = array<i64: 1, 32, 128>}, {transform_indices = @transform_5, window_bounds = array<i64: 1, 1, 32>}, {transform_indices = @transform_6, window_bounds = array<i64: 1, 1, 32>}, {transform_indices = @transform_7, window_bounds = array<i64: 1, 1, 32>}, {pipeline_mode = #tpu.pipeline_mode<synchronous>, transform_indices = @transform_8, window_bounds = array<i64: 1, 128>}, {transform_indices = @transform_9, window_bounds = array<i64: 1, 16, 128>}]} {
    %c0_i32 = arith.constant 0 : i32
    %0 = arith.cmpi eq, %arg2, %c0_i32 : i32
    %1 = arith.extui %0 : i1 to i32
    %c0_i32_0 = arith.constant 0 : i32
    %2 = arith.cmpi ne, %1, %c0_i32_0 : i32
    scf.if %2 {
      %cst_40 = arith.constant 0.000000e+00 : f32
      %66 = vector.broadcast %cst_40 : f32 to vector<16x128xf32>
      %c0_41 = arith.constant 0 : index
      %c0_42 = arith.constant 0 : index
      %67 = vector.load %arg13[%c0_41, %c0_42] : memref<16x128xf32, #tpu.memory_space<vmem>>, vector<16x128xf32>
      tpu.vector_store %arg13[%c0_41, %c0_42], %66 {strides = array<i32>} : memref<16x128xf32, #tpu.memory_space<vmem>>, vector<16x128xf32>,
    } else {
    }
    %c0 = arith.constant 0 : index
    %c0_1 = arith.constant 0 : index
    %c0_2 = arith.constant 0 : index
    %3 = vector.load %arg3[%c0, %c0_1, %c0_2] : memref<1x32x128xbf16, #tpu.memory_space<vmem>>, vector<1x32x128xbf16>
    %4 = vector.shape_cast %3 : vector<1x32x128xbf16> to vector<32x128xbf16>
    %c16_i32 = arith.constant 16 : i32
    %5 = arith.muli %arg1, %c16_i32 : i32
    %6 = tpu.assume_multiple %5, 16 : i32
    %c0_3 = arith.constant 0 : index
    %7 = arith.index_cast %6 : i32 to index
    %c0_4 = arith.constant 0 : index
    %8 = vector.load %arg3[%c0_3, %7, %c0_4] : memref<1x32x128xbf16, #tpu.memory_space<vmem>>, vector<1x16x128xbf16>
    %9 = vector.shape_cast %8 : vector<1x16x128xbf16> to vector<16x128xbf16>
    %c0_5 = arith.constant 0 : index
    %c0_6 = arith.constant 0 : index
    %c0_7 = arith.constant 0 : index
    %10 = vector.load %arg4[%c0_5, %c0_6, %c0_7] : memref<1x128x32xbf16, #tpu.memory_space<vmem>>, vector<1x128x32xbf16>
    %11 = vector.shape_cast %10 : vector<1x128x32xbf16> to vector<128x32xbf16>
    %cst = arith.constant dense<0.000000e+00> : vector<16x32xf32>
    %12 = tpu.matmul %9, %11, %cst {dimension_numbers = #tpu.dot_dimension_numbers<[1], [0], [0], [1], [0, 0, 1, 1], [], []>} : vector<16x128xbf16>, vector<128x32xbf16>, vector<16x32xf32> -> vector<16x32xf32>
    %c0_8 = arith.constant 0 : index
    %c0_9 = arith.constant 0 : index
    %c0_10 = arith.constant 0 : index
    %13 = vector.load %arg8[%c0_8, %c0_9, %c0_10] : memref<1x1x32xf32, #tpu.memory_space<vmem>>, vector<1x1x32xf32>
    %14 = vector.shape_cast %13 : vector<1x1x32xf32> to vector<1x32xf32>
    %15 = vector.broadcast %14 : vector<1x32xf32> to vector<16x32xf32>
    %16 = arith.addf %12, %15 : vector<16x32xf32>
    %cst_11 = arith.constant 0.176776692 : f32
    %17 = vector.broadcast %cst_11 : f32 to vector<16x32xf32>
    %18 = arith.mulf %16, %17 : vector<16x32xf32>
    %c0_12 = arith.constant 0 : index
    %c0_13 = arith.constant 0 : index
    %c0_14 = arith.constant 0 : index
    %19 = vector.load %arg5[%c0_12, %c0_13, %c0_14] : memref<1x128x32xbf16, #tpu.memory_space<vmem>>, vector<1x128x32xbf16>
    %20 = vector.shape_cast %19 : vector<1x128x32xbf16> to vector<128x32xbf16>
    %cst_15 = arith.constant dense<0.000000e+00> : vector<32x32xf32>
    %21 = tpu.matmul %4, %20, %cst_15 {dimension_numbers = #tpu.dot_dimension_numbers<[1], [0], [0], [1], [0, 0, 1, 1], [], []>} : vector<32x128xbf16>, vector<128x32xbf16>, vector<32x32xf32> -> vector<32x32xf32>
    %c0_16 = arith.constant 0 : index
    %c0_17 = arith.constant 0 : index
    %c0_18 = arith.constant 0 : index
    %22 = vector.load %arg9[%c0_16, %c0_17, %c0_18] : memref<1x1x32xf32, #tpu.memory_space<vmem>>, vector<1x1x32xf32>
    %23 = vector.shape_cast %22 : vector<1x1x32xf32> to vector<1x32xf32>
    %24 = vector.broadcast %23 : vector<1x32xf32> to vector<32x32xf32>
    %25 = arith.addf %21, %24 : vector<32x32xf32>
    %c0_19 = arith.constant 0 : index
    %c0_20 = arith.constant 0 : index
    %c0_21 = arith.constant 0 : index
    %26 = vector.load %arg6[%c0_19, %c0_20, %c0_21] : memref<1x128x32xbf16, #tpu.memory_space<vmem>>, vector<1x128x32xbf16>
    %27 = vector.shape_cast %26 : vector<1x128x32xbf16> to vector<128x32xbf16>
    %cst_22 = arith.constant dense<0.000000e+00> : vector<32x32xf32>
    %28 = tpu.matmul %4, %27, %cst_22 {dimension_numbers = #tpu.dot_dimension_numbers<[1], [0], [0], [1], [0, 0, 1, 1], [], []>} : vector<32x128xbf16>, vector<128x32xbf16>, vector<32x32xf32> -> vector<32x32xf32>
    %c0_23 = arith.constant 0 : index
    %c0_24 = arith.constant 0 : index
    %c0_25 = arith.constant 0 : index
    %29 = vector.load %arg10[%c0_23, %c0_24, %c0_25] : memref<1x1x32xf32, #tpu.memory_space<vmem>>, vector<1x1x32xf32>
    %30 = vector.shape_cast %29 : vector<1x1x32xf32> to vector<1x32xf32>
    %31 = vector.broadcast %30 : vector<1x32xf32> to vector<32x32xf32>
    %32 = arith.addf %28, %31 : vector<32x32xf32>
    %33 = arith.truncf %18 : vector<16x32xf32> to vector<16x32xbf16>
    %34 = arith.truncf %25 : vector<32x32xf32> to vector<32x32xbf16>
    %cst_26 = arith.constant dense<0.000000e+00> : vector<16x32xf32>
    %35 = tpu.matmul %33, %34, %cst_26 {dimension_numbers = #tpu.dot_dimension_numbers<[1], [1], [0], [0], [0, 0, 1, 0], [], []>} : vector<16x32xbf16>, vector<32x32xbf16>, vector<16x32xf32> -> vector<16x32xf32>
    %36 = tpu.iota {dimensions = array<i32: 0>} : vector<16x32xi32>
    %37 = vector.broadcast %6 : i32 to vector<16x32xi32>
    %38 = arith.addi %36, %37 : vector<16x32xi32>
    %39 = tpu.iota {dimensions = array<i32: 1>} : vector<16x32xi32>
    %40 = arith.cmpi sle, %39, %38 : vector<16x32xi32>
    %cst_27 = arith.constant -1.000000e+09 : f32
    %41 = vector.broadcast %cst_27 : f32 to vector<16x32xf32>
    %42 = arith.select %40, %35, %41 : vector<16x32xi1>, vector<16x32xf32>
    %cst_28 = arith.constant dense<0xFF800000> : vector<16xf32>
    %43 = vector.multi_reduction <maximumf>, %42, %cst_28 [1] : vector<16x32xf32> to vector<16xf32>
    %44 = vector.shape_cast %43 : vector<16xf32> to vector<16x1xf32>
    %45 = vector.broadcast %44 : vector<16x1xf32> to vector<16x32xf32>
    %46 = arith.subf %42, %45 : vector<16x32xf32>
    %47 = math.exp %46 : vector<16x32xf32>
    %cst_29 = arith.constant dense<0.000000e+00> : vector<16xf32>
    %48 = vector.multi_reduction <add>, %47, %cst_29 [1] : vector<16x32xf32> to vector<16xf32>
    %49 = vector.shape_cast %48 : vector<16xf32> to vector<16x1xf32>
    %50 = tpu.reciprocal %49 {approx = true} : vector<16x1xf32> -> vector<16x1xf32>
    %51 = vector.broadcast %50 : vector<16x1xf32> to vector<16x32xf32>
    %52 = arith.mulf %47, %51 : vector<16x32xf32>
    %53 = arith.truncf %52 : vector<16x32xf32> to vector<16x32xbf16>
    %54 = arith.truncf %32 : vector<32x32xf32> to vector<32x32xbf16>
    %cst_30 = arith.constant dense<0.000000e+00> : vector<16x32xf32>
    %55 = tpu.matmul %53, %54, %cst_30 {dimension_numbers = #tpu.dot_dimension_numbers<[1], [0], [0], [1], [0, 0, 1, 1], [], []>} : vector<16x32xbf16>, vector<32x32xbf16>, vector<16x32xf32> -> vector<16x32xf32>
    %c0_31 = arith.constant 0 : index
    %c0_32 = arith.constant 0 : index
    %56 = vector.load %arg13[%c0_31, %c0_32] : memref<16x128xf32, #tpu.memory_space<vmem>>, vector<16x128xf32>
    %57 = arith.truncf %55 : vector<16x32xf32> to vector<16x32xbf16>
    %c0_33 = arith.constant 0 : index
    %c0_34 = arith.constant 0 : index
    %c0_35 = arith.constant 0 : index
    %58 = vector.load %arg7[%c0_33, %c0_34, %c0_35] : memref<1x32x128xbf16, #tpu.memory_space<vmem>>, vector<1x32x128xbf16>
    %59 = vector.shape_cast %58 : vector<1x32x128xbf16> to vector<32x128xbf16>
    %cst_36 = arith.constant dense<0.000000e+00> : vector<16x128xf32>
    %60 = tpu.matmul %57, %59, %cst_36 {dimension_numbers = #tpu.dot_dimension_numbers<[1], [0], [0], [1], [0, 0, 1, 1], [], []>} : vector<16x32xbf16>, vector<32x128xbf16>, vector<16x128xf32> -> vector<16x128xf32>
    %61 = arith.addf %56, %60 : vector<16x128xf32>
    %c0_37 = arith.constant 0 : index
    %c0_38 = arith.constant 0 : index
    %62 = vector.load %arg13[%c0_37, %c0_38] : memref<16x128xf32, #tpu.memory_space<vmem>>, vector<16x128xf32>
    tpu.vector_store %arg13[%c0_37, %c0_38], %61 {strides = array<i32>} : memref<16x128xf32, #tpu.memory_space<vmem>>, vector<16x128xf32>,
    %c3_i32 = arith.constant 3 : i32
    %63 = arith.cmpi eq, %arg2, %c3_i32 : i32
    %64 = arith.extui %63 : i1 to i32
    %c0_i32_39 = arith.constant 0 : i32
    %65 = arith.cmpi ne, %64, %c0_i32_39 : i32
    scf.if %65 {
      %c0_40 = arith.constant 0 : index
      %c0_41 = arith.constant 0 : index
      %66 = vector.load %arg13[%c0_40, %c0_41] : memref<16x128xf32, #tpu.memory_space<vmem>>, vector<16x128xf32>
      %c0_42 = arith.constant 0 : index
      %c0_43 = arith.constant 0 : index
      %67 = vector.load %arg11[%c0_42, %c0_43] : memref<1x128xf32, #tpu.memory_space<vmem>>, vector<1x128xf32>
      %68 = vector.broadcast %67 : vector<1x128xf32> to vector<16x128xf32>
      %69 = arith.addf %66, %68 : vector<16x128xf32>
      %c0_44 = arith.constant 0 : index
      %c0_45 = arith.constant 0 : index
      %c0_46 = arith.constant 0 : index
      %70 = vector.load %arg12[%c0_44, %c0_45, %c0_46] : memref<1x16x128xf32, #tpu.memory_space<vmem>>, vector<1x16x128xf32>
      %71 = vector.shape_cast %70 : vector<1x16x128xf32> to vector<16x128xf32>
      %72 = vector.shape_cast %69 : vector<16x128xf32> to vector<1x16x128xf32>
      tpu.vector_store %arg12[%c0_44, %c0_45, %c0_46], %72 {strides = array<i32>} : memref<1x16x128xf32, #tpu.memory_space<vmem>>, vector<1x16x128xf32>,
    } else {
    }
    return
  }
  func.func @transform_0(%arg0: i32, %arg1: i32, %arg2: i32) -> (i32, i32, i32) {
    %c0_i32 = arith.constant 0 : i32
    %c0_i32_0 = arith.constant 0 : i32
    %c0_i32_1 = arith.constant 0 : i32
    return %arg0, %c0_i32, %c0_i32_0 : i32, i32, i32
  }
  func.func @transform_1(%arg0: i32, %arg1: i32, %arg2: i32) -> (i32, i32, i32) {
    %c0_i32 = arith.constant 0 : i32
    %c0_i32_0 = arith.constant 0 : i32
    %c0_i32_1 = arith.constant 0 : i32
    return %arg2, %c0_i32, %c0_i32_0 : i32, i32, i32
  }
  func.func @transform_2(%arg0: i32, %arg1: i32, %arg2: i32) -> (i32, i32, i32) {
    %c0_i32 = arith.constant 0 : i32
    %c0_i32_0 = arith.constant 0 : i32
    %c0_i32_1 = arith.constant 0 : i32
    return %arg2, %c0_i32, %c0_i32_0 : i32, i32, i32
  }
  func.func @transform_3(%arg0: i32, %arg1: i32, %arg2: i32) -> (i32, i32, i32) {
    %c0_i32 = arith.constant 0 : i32
    %c0_i32_0 = arith.constant 0 : i32
    %c0_i32_1 = arith.constant 0 : i32
    return %arg2, %c0_i32, %c0_i32_0 : i32, i32, i32
  }
  func.func @transform_4(%arg0: i32, %arg1: i32, %arg2: i32) -> (i32, i32, i32) {
    %c0_i32 = arith.constant 0 : i32
    %c0_i32_0 = arith.constant 0 : i32
    %c0_i32_1 = arith.constant 0 : i32
    return %arg2, %c0_i32, %c0_i32_0 : i32, i32, i32
  }
  func.func @transform_5(%arg0: i32, %arg1: i32, %arg2: i32) -> (i32, i32, i32) {
    %c0_i32 = arith.constant 0 : i32
    %c0_i32_0 = arith.constant 0 : i32
    %c0_i32_1 = arith.constant 0 : i32
    return %arg2, %c0_i32, %c0_i32_0 : i32, i32, i32
  }
  func.func @transform_6(%arg0: i32, %arg1: i32, %arg2: i32) -> (i32, i32, i32) {
    %c0_i32 = arith.constant 0 : i32
    %c0_i32_0 = arith.constant 0 : i32
    %c0_i32_1 = arith.constant 0 : i32
    return %arg2, %c0_i32, %c0_i32_0 : i32, i32, i32
  }
  func.func @transform_7(%arg0: i32, %arg1: i32, %arg2: i32) -> (i32, i32, i32) {
    %c0_i32 = arith.constant 0 : i32
    %c0_i32_0 = arith.constant 0 : i32
    %c0_i32_1 = arith.constant 0 : i32
    return %arg2, %c0_i32, %c0_i32_0 : i32, i32, i32
  }
  func.func @transform_8(%arg0: i32, %arg1: i32, %arg2: i32) -> (i32, i32) {
    %c0_i32 = arith.constant 0 : i32
    %c0_i32_0 = arith.constant 0 : i32
    %c0_i32_1 = arith.constant 0 : i32
    return %c0_i32, %c0_i32_0 : i32, i32
  }
  func.func @transform_9(%arg0: i32, %arg1: i32, %arg2: i32) -> (i32, i32, i32) {
    %c0_i32 = arith.constant 0 : i32
    %c0_i32_0 = arith.constant 0 : i32
    return %arg0, %arg1, %c0_i32 : i32, i32, i32
  }
}

</mosaic_0001>

<llo_original>
// kernel: tpu_custom_call.1
$region0: #{tpu_custom_call.1}
  #allocation0 [shape = 'u32[]', space=smem, size = 0x4, offset = 0x4, fixed_abs, tag = 'smem constant byte address 0x4 - core index']
  #allocation1 [shape = 'u32[144,128]{1,0:T(1,128)}', space=vmem, size = 0x12000, scoped, tag = 'internal scratch']
  #allocation2 [shape = 'f32[16,128]{1,0:T(8,128)}', space=vmem, size = 0x2000, scoped, tag = 'scratch operand']
  %s0 = inlined_call_operand.hbm [shape: bf16[2,32,128], index: 0, kind: input, shape index: {}]
  %s1 = inlined_call_operand.hbm [shape: bf16[4,128,32], index: 1, kind: input, shape index: {}]
  %s2 = inlined_call_operand.hbm [shape: bf16[4,128,32], index: 2, kind: input, shape index: {}]
  %s3 = inlined_call_operand.hbm [shape: bf16[4,128,32], index: 3, kind: input, shape index: {}]
  %s4 = inlined_call_operand.hbm [shape: bf16[4,32,128], index: 4, kind: input, shape index: {}]
  %s5 = inlined_call_operand.hbm [shape: f32[4,1,32], index: 5, kind: input, shape index: {}]
  %s6 = inlined_call_operand.hbm [shape: f32[4,1,32], index: 6, kind: input, shape index: {}]
  %s7 = inlined_call_operand.hbm [shape: f32[4,1,32], index: 7, kind: input, shape index: {}]
  %s8 = inlined_call_operand.hbm [shape: f32[1,128], index: 8, kind: input, shape index: {}]
  %s9 = inlined_call_operand.hbm [shape: f32[2,32,128], index: 9, kind: output, shape index: {}]
  %s10 = sld [smem:[#allocation0]]
  $region113: #{tpu_custom_call.1} parent=0
    _
  %s12 = ssub.s32 1, %s10
  %s13 = scalar_select 0, %s12, %s10
  $region1: #{tpu_custom_call.1} parent=0
    #allocation3 [shape = 'u8[16384]{0}', space=vmem, size = 0x4000, scoped, tag = 'input window, operand 0']
    #allocation4 [shape = 's32[2]{0}', space=sflag, size = 0x8, scoped, tag = 'scoped memory for tpu_custom_call.1']
    #allocation5 [shape = 's32[2]{0}', space=sflag, size = 0x8, scoped, tag = 'scoped memory for tpu_custom_call.1']
    #allocation6 [shape = 'u8[65536]{0}', space=vmem, size = 0x10000, scoped, tag = 'input window, operand 1']
    #allocation7 [shape = 's32[2]{0}', space=sflag, size = 0x8, scoped, tag = 'scoped memory for tpu_custom_call.1']
    #allocation8 [shape = 'u8[65536]{0}', space=vmem, size = 0x10000, scoped, tag = 'input window, operand 2']
    #allocation9 [shape = 'u8[65536]{0}', space=vmem, size = 0x10000, scoped, tag = 'input window, operand 3']
    #allocation10 [shape = 's32[2]{0}', space=sflag, size = 0x8, scoped, tag = 'scoped memory for tpu_custom_call.1']
    #allocation11 [shape = 'u8[16384]{0}', space=vmem, size = 0x4000, scoped, tag = 'input window, operand 4']
    #allocation12 [shape = 'u8[1024]{0}', space=vmem, size = 0x400, scoped, tag = 'input window, operand 5']
    #allocation13 [shape = 's32[2]{0}', space=sflag, size = 0x8, scoped, tag = 'scoped memory for tpu_custom_call.1']
    #allocation14 [shape = 'u8[1024]{0}', space=vmem, size = 0x400, scoped, tag = 'input window, operand 6']
    #allocation15 [shape = 'u8[1024]{0}', space=vmem, size = 0x400, scoped, tag = 'input window, operand 7']
    #allocation16 [shape = 's32[2]{0}', space=sflag, size = 0x8, scoped, tag = 'scoped memory for tpu_custom_call.1']
    #allocation17 [shape = 'u8[512]{0}', space=vmem, size = 0x400, scoped, tag = 'input window, operand 8, single buffered']
    #allocation18 [shape = 'u8[16384]{0}', space=vmem, size = 0x4000, scoped, tag = 'output window, operand 0']
    %14 = vsyncpa [#allocation4], 0
    %s15 = scalar_lea.sflag [#allocation4], 1
    %16 = vsyncpa %s15, 0
    %17 = vsyncpa [#allocation7], 0
    %s18 = scalar_lea.sflag [#allocation7], 1
    %19 = vsyncpa %s18, 0
    %20 = vsyncpa [#allocation10], 0
    %s21 = scalar_lea.sflag [#allocation10], 1
    %22 = vsyncpa %s21, 0
    %23 = vsyncpa [#allocation13], 0
    %s24 = scalar_lea.sflag [#allocation13], 1
    %25 = vsyncpa %s24, 0
    %26 = vsyncpa [#allocation16], 0
    %s27 = scalar_lea.sflag [#allocation16], 1
    %28 = vsyncpa %s27, 0
    %29 = vsyncpa [#allocation5], 0
    %s30 = scalar_lea.sflag [#allocation5], 1
    %31 = vsyncpa %s30, 0
    loop: start=0, step=1, limit=18
    $region2: #{tpu_custom_call.1} parent=1 // loop_pre_header
      _
    $region3: #{tpu_custom_call.1} parent=1 // loop_header
      %s33 = sphi 0, %s37
      %p34 = scmp.ge.s32.totalorder %s33, 18
      %s40 = sphi 0, %s59
      %s41 = sphi 0, %s55
      %s42 = sphi 0, %s51
      %s43 = sphi 0, %s40
      %s44 = sphi 0, %s41
      %s45 = sphi 0, %s42
      %s46 = sphi 0, %s43
      %s47 = sphi 0, %s44
      %s48 = sphi 0, %s45
      %s62 = sphi 0, %s64
      %s65 = sphi 0, %s62
      %s66 = sphi 0, %s65
      %s82 = sphi 0, %s66
      %s88 = sphi 0, %s90
      %s91 = sphi 0, %s88
      %s92 = sphi 0, %s91
      %s108 = sphi 0, %s92
      %s114 = sphi 0, %s116
      %s117 = sphi 0, %s114
      %s118 = sphi 0, %s117
      %s134 = sphi 0, %s118
      %s140 = sphi 0, %s142
      %s143 = sphi 0, %s140
      %s144 = sphi 0, %s143
      %s160 = sphi 0, %s144
      %s166 = sphi 0, %s168
      %s169 = sphi 0, %s166
      %s170 = sphi 0, %s169
      %s186 = sphi 0, %s170
      %s192 = sphi 0, %s194
      %s195 = sphi 0, %s192
      %s196 = sphi 0, %s195
      %s212 = sphi 0, %s196
      %s218 = sphi 0, %s220
      %s221 = sphi 0, %s218
      %s222 = sphi 0, %s221
      %s238 = sphi 0, %s222
      %s244 = sphi 0, %s246
      %s247 = sphi 0, %s244
      %s248 = sphi 0, %s247
      %s264 = sphi 0, %s248
      %s268 = sphi 0, %s268
      %s270 = sphi 0, %s268
      %s271 = sphi 0, %s270
      %s285 = sphi 0, %s271
      %s293 = sphi 0, %s295
      %s296 = sphi 0, %s293
      %s297 = sphi 0, %s296
      %s313 = sphi 0, %s297
    $region4: #{tpu_custom_call.1} parent=1 // loop_header_branch
      %36 = sbr.rel (%p34) target = $region8
    $region5: #{tpu_custom_call.1} parent=1 // loop_body
      %s38 = ssub.s32 %s33, 1
      %s39 = ssub.s32 %s33, 2
      %s49 = sadd.s32 1, %s42
      %p50 = scmp.ge.s32.totalorder %s49, 4
      %s51 = scalar_select %p50, 0, %s49
      %s52 = sadd.s32 1, %s41
      %s53 = scalar_select %p50, %s52, %s41
      %p54 = scmp.ge.s32.totalorder %s53, 2
      %s55 = scalar_select %p54, 0, %s53
      %s56 = sadd.s32 1, %s40
      %s57 = scalar_select %p54, %s56, %s40
      %p58 = scmp.ge.s32.totalorder %s57, 2
      %s59 = scalar_select %p58, 0, %s57
      %s60 = ssub.s32 %s40, %s59
      %p61 = scmp.eq.s32.totalorder %s60, 0
      %s63 = sadd.s32 %s62, 1
      %s64 = scalar_select %p61, %s62, %s63
      %p67 = pneg %p61
      %p68 = scmp.eq.s32.totalorder %s33, 15
      %p69 = por %p67, %p68
      %p70 = scmp.ne.s32.totalorder %s62, %s65
      %p71 = scmp.eq.s32.totalorder %s33, 0
      %p72 = por %p70, %p71
      %p73 = scmp.ne.s32.totalorder %s62, %s65
      %p74 = scmp.eq.s32.totalorder %s38, 15
      %p75 = por %p73, %p74
      %p76 = scmp.ne.s32.totalorder %s65, %s66
      %p77 = scmp.eq.s32.totalorder %s38, 0
      %p78 = por %p76, %p77
      %p79 = scmp.ne.s32.totalorder %s65, %s66
      %p80 = scmp.eq.s32.totalorder %s39, 15
      %p81 = por %p79, %p80
      %p83 = scmp.ne.s32.totalorder %s66, %s82
      %p84 = scmp.eq.s32.totalorder %s39, 0
      %p85 = por %p83, %p84
      %s86 = ssub.s32 %s42, %s51
      %p87 = scmp.eq.s32.totalorder %s86, 0
      %s89 = sadd.s32 %s88, 1
      %s90 = scalar_select %p87, %s88, %s89
      %p93 = pneg %p87
      %p94 = scmp.eq.s32.totalorder %s33, 15
      %p95 = por %p93, %p94
      %p96 = scmp.ne.s32.totalorder %s88, %s91
      %p97 = scmp.eq.s32.totalorder %s33, 0
      %p98 = por %p96, %p97
      %p99 = scmp.ne.s32.totalorder %s88, %s91
      %p100 = scmp.eq.s32.totalorder %s38, 15
      %p101 = por %p99, %p100
      %p102 = scmp.ne.s32.totalorder %s91, %s92
      %p103 = scmp.eq.s32.totalorder %s38, 0
      %p104 = por %p102, %p103
      %p105 = scmp.ne.s32.totalorder %s91, %s92
      %p106 = scmp.eq.s32.totalorder %s39, 15
      %p107 = por %p105, %p106
      %p109 = scmp.ne.s32.totalorder %s92, %s108
      %p110 = scmp.eq.s32.totalorder %s39, 0
      %p111 = por %p109, %p110
      %s112 = ssub.s32 %s42, %s51
      %p113 = scmp.eq.s32.totalorder %s112, 0
      %s115 = sadd.s32 %s114, 1
      %s116 = scalar_select %p113, %s114, %s115
      %p119 = pneg %p113
      %p120 = scmp.eq.s32.totalorder %s33, 15
      %p121 = por %p119, %p120
      %p122 = scmp.ne.s32.totalorder %s114, %s117
      %p123 = scmp.eq.s32.totalorder %s33, 0
      %p124 = por %p122, %p123
      %p125 = scmp.ne.s32.totalorder %s114, %s117
      %p126 = scmp.eq.s32.totalorder %s38, 15
      %p127 = por %p125, %p126
      %p128 = scmp.ne.s32.totalorder %s117, %s118
      %p129 = scmp.eq.s32.totalorder %s38, 0
      %p130 = por %p128, %p129
      %p131 = scmp.ne.s32.totalorder %s117, %s118
      %p132 = scmp.eq.s32.totalorder %s39, 15
      %p133 = por %p131, %p132
      %p135 = scmp.ne.s32.totalorder %s118, %s134
      %p136 = scmp.eq.s32.totalorder %s39, 0
      %p137 = por %p135, %p136
      %s138 = ssub.s32 %s42, %s51
      %p139 = scmp.eq.s32.totalorder %s138, 0
      %s141 = sadd.s32 %s140, 1
      %s142 = scalar_select %p139, %s140, %s141
      %p145 = pneg %p139
      %p146 = scmp.eq.s32.totalorder %s33, 15
      %p147 = por %p145, %p146
      %p148 = scmp.ne.s32.totalorder %s140, %s143
      %p149 = scmp.eq.s32.totalorder %s33, 0
      %p150 = por %p148, %p149
      %p151 = scmp.ne.s32.totalorder %s140, %s143
      %p152 = scmp.eq.s32.totalorder %s38, 15
      %p153 = por %p151, %p152
      %p154 = scmp.ne.s32.totalorder %s143, %s144
      %p155 = scmp.eq.s32.totalorder %s38, 0
      %p156 = por %p154, %p155
      %p157 = scmp.ne.s32.totalorder %s143, %s144
      %p158 = scmp.eq.s32.totalorder %s39, 15
      %p159 = por %p157, %p158
      %p161 = scmp.ne.s32.totalorder %s144, %s160
      %p162 = scmp.eq.s32.totalorder %s39, 0
      %p163 = por %p161, %p162
      %s164 = ssub.s32 %s42, %s51
      %p165 = scmp.eq.s32.totalorder %s164, 0
      %s167 = sadd.s32 %s166, 1
      %s168 = scalar_select %p165, %s166, %s167
      %p171 = pneg %p165
      %p172 = scmp.eq.s32.totalorder %s33, 15
      %p173 = por %p171, %p172
      %p174 = scmp.ne.s32.totalorder %s166, %s169
      %p175 = scmp.eq.s32.totalorder %s33, 0
      %p176 = por %p174, %p175
      %p177 = scmp.ne.s32.totalorder %s166, %s169
      %p178 = scmp.eq.s32.totalorder %s38, 15
      %p179 = por %p177, %p178
      %p180 = scmp.ne.s32.totalorder %s169, %s170
      %p181 = scmp.eq.s32.totalorder %s38, 0
      %p182 = por %p180, %p181
      %p183 = scmp.ne.s32.totalorder %s169, %s170
      %p184 = scmp.eq.s32.totalorder %s39, 15
      %p185 = por %p183, %p184
      %p187 = scmp.ne.s32.totalorder %s170, %s186
      %p188 = scmp.eq.s32.totalorder %s39, 0
      %p189 = por %p187, %p188
      %s190 = ssub.s32 %s42, %s51
      %p191 = scmp.eq.s32.totalorder %s190, 0
      %s193 = sadd.s32 %s192, 1
      %s194 = scalar_select %p191, %s192, %s193
      %p197 = pneg %p191
      %p198 = scmp.eq.s32.totalorder %s33, 15
      %p199 = por %p197, %p198
      %p200 = scmp.ne.s32.totalorder %s192, %s195
      %p201 = scmp.eq.s32.totalorder %s33, 0
      %p202 = por %p200, %p201
      %p203 = scmp.ne.s32.totalorder %s192, %s195
      %p204 = scmp.eq.s32.totalorder %s38, 15
      %p205 = por %p203, %p204
      %p206 = scmp.ne.s32.totalorder %s195, %s196
      %p207 = scmp.eq.s32.totalorder %s38, 0
      %p208 = por %p206, %p207
      %p209 = scmp.ne.s32.totalorder %s195, %s196
      %p210 = scmp.eq.s32.totalorder %s39, 15
      %p211 = por %p209, %p210
      %p213 = scmp.ne.s32.totalorder %s196, %s212
      %p214 = scmp.eq.s32.totalorder %s39, 0
      %p215 = por %p213, %p214
      %s216 = ssub.s32 %s42, %s51
      %p217 = scmp.eq.s32.totalorder %s216, 0
      %s219 = sadd.s32 %s218, 1
      %s220 = scalar_select %p217, %s218, %s219
      %p223 = pneg %p217
      %p224 = scmp.eq.s32.totalorder %s33, 15
      %p225 = por %p223, %p224
      %p226 = scmp.ne.s32.totalorder %s218, %s221
      %p227 = scmp.eq.s32.totalorder %s33, 0
      %p228 = por %p226, %p227
      %p229 = scmp.ne.s32.totalorder %s218, %s221
      %p230 = scmp.eq.s32.totalorder %s38, 15
      %p231 = por %p229, %p230
      %p232 = scmp.ne.s32.totalorder %s221, %s222
      %p233 = scmp.eq.s32.totalorder %s38, 0
      %p234 = por %p232, %p233
      %p235 = scmp.ne.s32.totalorder %s221, %s222
      %p236 = scmp.eq.s32.totalorder %s39, 15
      %p237 = por %p235, %p236
      %p239 = scmp.ne.s32.totalorder %s222, %s238
      %p240 = scmp.eq.s32.totalorder %s39, 0
      %p241 = por %p239, %p240
      %s242 = ssub.s32 %s42, %s51
      %p243 = scmp.eq.s32.totalorder %s242, 0
      %s245 = sadd.s32 %s244, 1
      %s246 = scalar_select %p243, %s244, %s245
      %p249 = pneg %p243
      %p250 = scmp.eq.s32.totalorder %s33, 15
      %p251 = por %p249, %p250
      %p252 = scmp.ne.s32.totalorder %s244, %s247
      %p253 = scmp.eq.s32.totalorder %s33, 0
      %p254 = por %p252, %p253
      %p255 = scmp.ne.s32.totalorder %s244, %s247
      %p256 = scmp.eq.s32.totalorder %s38, 15
      %p257 = por %p255, %p256
      %p258 = scmp.ne.s32.totalorder %s247, %s248
      %p259 = scmp.eq.s32.totalorder %s38, 0
      %p260 = por %p258, %p259
      %p261 = scmp.ne.s32.totalorder %s247, %s248
      %p262 = scmp.eq.s32.totalorder %s39, 15
      %p263 = por %p261, %p262
      %p265 = scmp.ne.s32.totalorder %s248, %s264
      %p266 = scmp.eq.s32.totalorder %s39, 0
      %p267 = por %p265, %p266
      %s269 = sadd.s32 %s268, 1
      %p272 = scmp.eq.s32.totalorder %s33, 15
      %p273 = scmp.ne.s32.totalorder %s268, %s270
      %p274 = scmp.eq.s32.totalorder %s33, 0
      %p275 = por %p273, %p274
      %p276 = scmp.ne.s32.totalorder %s268, %s270
      %p277 = scmp.eq.s32.totalorder %s38, 15
      %p278 = por %p276, %p277
      %p279 = scmp.ne.s32.totalorder %s270, %s271
      %p280 = scmp.eq.s32.totalorder %s38, 0
      %p281 = por %p279, %p280
      %p282 = scmp.ne.s32.totalorder %s270, %s271
      %p283 = scmp.eq.s32.totalorder %s39, 15
      %p284 = por %p282, %p283
      %p286 = scmp.ne.s32.totalorder %s271, %s285
      %p287 = scmp.eq.s32.totalorder %s39, 0
      %p288 = por %p286, %p287
      %s289 = ssub.s32 %s40, %s59
      %s290 = ssub.s32 %s41, %s55
      %s291 = sor.u32 %s289, %s290
      %p292 = scmp.eq.s32.totalorder %s291, 0
      %s294 = sadd.s32 %s293, 1
      %s295 = scalar_select %p292, %s293, %s294
      %p298 = pneg %p292
      %p299 = scmp.eq.s32.totalorder %s33, 15
      %p300 = por %p298, %p299
      %p301 = scmp.ne.s32.totalorder %s293, %s296
      %p302 = scmp.eq.s32.totalorder %s33, 0
      %p303 = por %p301, %p302
      %p304 = scmp.ne.s32.totalorder %s293, %s296
      %p305 = scmp.eq.s32.totalorder %s38, 15
      %p306 = por %p304, %p305
      %p307 = scmp.ne.s32.totalorder %s296, %s297
      %p308 = scmp.eq.s32.totalorder %s38, 0
      %p309 = por %p307, %p308
      %p310 = scmp.ne.s32.totalorder %s296, %s297
      %p311 = scmp.eq.s32.totalorder %s39, 15
      %p312 = por %p310, %p311
      %p314 = scmp.ne.s32.totalorder %s297, %s313
      %p315 = scmp.eq.s32.totalorder %s39, 0
      %p316 = por %p314, %p315
      %p317 = scmp.le.s32.totalorder 1, %s33
      %p318 = scmp.lt.s32.totalorder %s33, 17
      %p319 = pnand %p317, %p318
      %p320 = pneg %p319
      // Predicated region
      $region9: #{tpu_custom_call.1} parent=5 // pred_check
        _
      $region10: #{tpu_custom_call.1} parent=5 // pred_check_branch
        %322 = sbr.rel (%p319) target = $region12
      $region11: #{tpu_custom_call.1} parent=5 // pred_region
        %s323 = ssub.s32 %s33, 1
        // Predicated region
        $region13: #{tpu_custom_call.1} parent=11 // pred_check
          %p324 = pneg %p281
        $region14: #{tpu_custom_call.1} parent=11 // pred_check_branch
          %326 = sbr.rel (%p324) target = $region16
        $region15: #{tpu_custom_call.1} parent=11 // pred_region
          %s328 = ssub.s32 16, 16
          %329 = vsyncadd [#allocation16], %s328
          %s331 = sshll.u32 [#allocation17], 4
          %s332 = int_to_ptr.vmem [resolvable:$true] %s331
          %334 = dma.hbm_to_vmem [thread:$0]  %s8, 16, %s332, [#allocation16]
        $region16: #{tpu_custom_call.1} parent=11 // pred_fallthru
          _
      $region12: #{tpu_custom_call.1} parent=5 // pred_fallthru
        _
      %p335 = scmp.lt.s32.totalorder %s33, 16
      // Predicated region
      $region17: #{tpu_custom_call.1} parent=5 // pred_check
        %p336 = pneg %p335
      $region18: #{tpu_custom_call.1} parent=5 // pred_check_branch
        %338 = sbr.rel (%p336) target = $region20
      $region19: #{tpu_custom_call.1} parent=5 // pred_region
        // Predicated region
        $region21: #{tpu_custom_call.1} parent=19 // pred_check
          %p339 = pneg %p72
        $region22: #{tpu_custom_call.1} parent=19 // pred_check_branch
          %341 = sbr.rel (%p339) target = $region24
        $region23: #{tpu_custom_call.1} parent=19 // pred_region
          %s342 = sand.u32 %s62, 1
          %s343 = scalar_lea.sflag [#allocation4], %s342
          %s344 = sand.u32 %s62, 1
          %s345 = smul.addr %s344, 16
          %s346 = scalar_lea.vmem [#allocation3], %s345
          %s348 = ssub.s32 256, 256
          %349 = vsyncadd %s343, %s348
          %s350 = smul.addr %s40, 4
          %s351 = smul.addr %s350, 64
          %s352 = scalar_lea.hbm %s0, %s351
          %s353 = sshll.u32 %s346, 4
          %s354 = int_to_ptr.vmem [resolvable:$true] %s353
          %359 = dma.hbm_to_vmem [thread:$0]  %s352, 256, %s354, %s343, 64, 64, 4
        $region24: #{tpu_custom_call.1} parent=19 // pred_fallthru
          _
        // Predicated region
        $region25: #{tpu_custom_call.1} parent=19 // pred_check
          %p360 = pneg %p98
        $region26: #{tpu_custom_call.1} parent=19 // pred_check_branch
          %362 = sbr.rel (%p360) target = $region28
        $region27: #{tpu_custom_call.1} parent=19 // pred_region
          %s363 = sand.u32 %s33, 1
          %s364 = scalar_lea.sflag [#allocation7], %s363
          %s365 = sand.u32 %s88, 1
          %s366 = smul.addr %s365, 64
          %s367 = scalar_lea.vmem [#allocation6], %s366
          %s369 = ssub.s32 1024, 1024
          %370 = vsyncadd %s364, %s369
          %s371 = smul.addr %s42, 16
          %s372 = smul.addr %s371, 64
          %s373 = scalar_lea.hbm %s1, %s372
          %s374 = sshll.u32 %s367, 4
          %s375 = int_to_ptr.vmem [resolvable:$true] %s374
          %380 = dma.hbm_to_vmem [thread:$0]  %s373, 1024, %s375, %s364, 64, 64, 4
        $region28: #{tpu_custom_call.1} parent=19 // pred_fallthru
          _
        // Predicated region
        $region29: #{tpu_custom_call.1} parent=19 // pred_check
          %p381 = pneg %p124
        $region30: #{tpu_custom_call.1} parent=19 // pred_check_branch
          %383 = sbr.rel (%p381) target = $region32
        $region31: #{tpu_custom_call.1} parent=19 // pred_region
          %s384 = sand.u32 %s33, 1
          %s385 = scalar_lea.sflag [#allocation7], %s384
          %s386 = sand.u32 %s114, 1
          %s387 = smul.addr %s386, 64
          %s388 = scalar_lea.vmem [#allocation8], %s387
          %s390 = ssub.s32 1024, 1024
          %391 = vsyncadd %s385, %s390
          %s392 = smul.addr %s42, 16
          %s393 = smul.addr %s392, 64
          %s394 = scalar_lea.hbm %s2, %s393
          %s395 = sshll.u32 %s388, 4
          %s396 = int_to_ptr.vmem [resolvable:$true] %s395
          %401 = dma.hbm_to_vmem [thread:$0]  %s394, 1024, %s396, %s385, 64, 64, 4
        $region32: #{tpu_custom_call.1} parent=19 // pred_fallthru
          _
        // Predicated region
        $region33: #{tpu_custom_call.1} parent=19 // pred_check
          %p402 = pneg %p150
        $region34: #{tpu_custom_call.1} parent=19 // pred_check_branch
          %404 = sbr.rel (%p402) target = $region36
        $region35: #{tpu_custom_call.1} parent=19 // pred_region
          %s405 = sand.u32 %s33, 1
          %s406 = scalar_lea.sflag [#allocation10], %s405
          %s407 = sand.u32 %s140, 1
          %s408 = smul.addr %s407, 64
          %s409 = scalar_lea.vmem [#allocation9], %s408
          %s411 = ssub.s32 1024, 1024
          %412 = vsyncadd %s406, %s411
          %s413 = smul.addr %s42, 16
          %s414 = smul.addr %s413, 64
          %s415 = scalar_lea.hbm %s3, %s414
          %s416 = sshll.u32 %s409, 4
          %s417 = int_to_ptr.vmem [resolvable:$true] %s416
          %422 = dma.hbm_to_vmem [thread:$0]  %s415, 1024, %s417, %s406, 64, 64, 4
        $region36: #{tpu_custom_call.1} parent=19 // pred_fallthru
          _
        // Predicated region
        $region37: #{tpu_custom_call.1} parent=19 // pred_check
          %p423 = pneg %p176
        $region38: #{tpu_custom_call.1} parent=19 // pred_check_branch
          %425 = sbr.rel (%p423) target = $region40
        $region39: #{tpu_custom_call.1} parent=19 // pred_region
          %s426 = sand.u32 %s33, 1
          %s427 = scalar_lea.sflag [#allocation10], %s426
          %s428 = sand.u32 %s166, 1
          %s429 = smul.addr %s428, 16
          %s430 = scalar_lea.vmem [#allocation11], %s429
          %s432 = ssub.s32 256, 256
          %433 = vsyncadd %s427, %s432
          %s434 = smul.addr %s42, 4
          %s435 = smul.addr %s434, 64
          %s436 = scalar_lea.hbm %s4, %s435
          %s437 = sshll.u32 %s430, 4
          %s438 = int_to_ptr.vmem [resolvable:$true] %s437
          %443 = dma.hbm_to_vmem [thread:$0]  %s436, 256, %s438, %s427, 64, 64, 4
        $region40: #{tpu_custom_call.1} parent=19 // pred_fallthru
          _
        // Predicated region
        $region41: #{tpu_custom_call.1} parent=19 // pred_check
          %p444 = pneg %p202
        $region42: #{tpu_custom_call.1} parent=19 // pred_check_branch
          %446 = sbr.rel (%p444) target = $region44
        $region43: #{tpu_custom_call.1} parent=19 // pred_region
          %s447 = sand.u32 %s33, 1
          %s448 = scalar_lea.sflag [#allocation13], %s447
          %s449 = sand.u32 %s192, 1
          %s450 = scalar_lea.vmem [#allocation12], %s449
          %s452 = ssub.s32 16, 16
          %453 = vsyncadd %s448, %s452
          %s454 = smul.addr %s42, 16
          %s455 = scalar_lea.hbm %s5, %s454
          %s457 = sshll.u32 %s450, 4
          %s458 = int_to_ptr.vmem [resolvable:$true] %s457
          %460 = dma.hbm_to_vmem [thread:$0]  %s455, 16, %s458, %s448
        $region44: #{tpu_custom_call.1} parent=19 // pred_fallthru
          _
        // Predicated region
        $region45: #{tpu_custom_call.1} parent=19 // pred_check
          %p461 = pneg %p228
        $region46: #{tpu_custom_call.1} parent=19 // pred_check_branch
          %463 = sbr.rel (%p461) target = $region48
        $region47: #{tpu_custom_call.1} parent=19 // pred_region
          %s464 = sand.u32 %s33, 1
          %s465 = scalar_lea.sflag [#allocation13], %s464
          %s466 = sand.u32 %s218, 1
          %s467 = scalar_lea.vmem [#allocation14], %s466
          %s469 = ssub.s32 16, 16
          %470 = vsyncadd %s465, %s469
          %s471 = smul.addr %s42, 16
          %s472 = scalar_lea.hbm %s6, %s471
          %s474 = sshll.u32 %s467, 4
          %s475 = int_to_ptr.vmem [resolvable:$true] %s474
          %477 = dma.hbm_to_vmem [thread:$0]  %s472, 16, %s475, %s465
        $region48: #{tpu_custom_call.1} parent=19 // pred_fallthru
          _
        // Predicated region
        $region49: #{tpu_custom_call.1} parent=19 // pred_check
          %p478 = pneg %p254
        $region50: #{tpu_custom_call.1} parent=19 // pred_check_branch
          %480 = sbr.rel (%p478) target = $region52
        $region51: #{tpu_custom_call.1} parent=19 // pred_region
          %s481 = sand.u32 %s33, 1
          %s482 = scalar_lea.sflag [#allocation16], %s481
          %s483 = sand.u32 %s244, 1
          %s484 = scalar_lea.vmem [#allocation15], %s483
          %s486 = ssub.s32 16, 16
          %487 = vsyncadd %s482, %s486
          %s488 = smul.addr %s42, 16
          %s489 = scalar_lea.hbm %s7, %s488
          %s491 = sshll.u32 %s484, 4
          %s492 = int_to_ptr.vmem [resolvable:$true] %s491
          %494 = dma.hbm_to_vmem [thread:$0]  %s489, 16, %s492, %s482
        $region52: #{tpu_custom_call.1} parent=19 // pred_fallthru
          _
      $region20: #{tpu_custom_call.1} parent=5 // pred_fallthru
        _
      %p495 = scmp.le.s32.totalorder 1, %s33
      %p496 = scmp.lt.s32.totalorder %s33, 17
      %p497 = pnand %p495, %p496
      %p498 = pneg %p497
      // Predicated region
      $region53: #{tpu_custom_call.1} parent=5 // pred_check
        _
      $region54: #{tpu_custom_call.1} parent=5 // pred_check_branch
        %500 = sbr.rel (%p497) target = $region56
      $region55: #{tpu_custom_call.1} parent=5 // pred_region
        %s501 = ssub.s32 %s33, 1
        %s502 = sand.u32 %s65, 1
        %s503 = scalar_lea.sflag [#allocation4], %s502
        %s504 = sand.u32 %s65, 1
        %s505 = smul.addr %s504, 16
        %s506 = scalar_lea.vmem [#allocation3], %s505
        // Predicated region
        $region57: #{tpu_custom_call.1} parent=55 // pred_check
          %p507 = pneg %p78
        $region58: #{tpu_custom_call.1} parent=55 // pred_check_branch
          %509 = sbr.rel (%p507) target = $region60
        $region59: #{tpu_custom_call.1} parent=55 // pred_region
          %510 = dma.done %s503, 256
        $region60: #{tpu_custom_call.1} parent=55 // pred_fallthru
          _
        %s511 = sand.u32 %s38, 1
        %s512 = scalar_lea.sflag [#allocation7], %s511
        %s513 = sand.u32 %s91, 1
        %s514 = smul.addr %s513, 64
        %s515 = scalar_lea.vmem [#allocation6], %s514
        // Predicated region
        $region61: #{tpu_custom_call.1} parent=55 // pred_check
          %p516 = pneg %p104
        $region62: #{tpu_custom_call.1} parent=55 // pred_check_branch
          %518 = sbr.rel (%p516) target = $region64
        $region63: #{tpu_custom_call.1} parent=55 // pred_region
          %519 = dma.done %s512, 1024
        $region64: #{tpu_custom_call.1} parent=55 // pred_fallthru
          _
        %s520 = sand.u32 %s38, 1
        %s521 = scalar_lea.sflag [#allocation7], %s520
        %s522 = sand.u32 %s117, 1
        %s523 = smul.addr %s522, 64
        %s524 = scalar_lea.vmem [#allocation8], %s523
        // Predicated region
        $region65: #{tpu_custom_call.1} parent=55 // pred_check
          %p525 = pneg %p130
        $region66: #{tpu_custom_call.1} parent=55 // pred_check_branch
          %527 = sbr.rel (%p525) target = $region68
        $region67: #{tpu_custom_call.1} parent=55 // pred_region
          %528 = dma.done %s521, 1024
        $region68: #{tpu_custom_call.1} parent=55 // pred_fallthru
          _
        %s529 = sand.u32 %s38, 1
        %s530 = scalar_lea.sflag [#allocation10], %s529
        %s531 = sand.u32 %s143, 1
        %s532 = smul.addr %s531, 64
        %s533 = scalar_lea.vmem [#allocation9], %s532
        // Predicated region
        $region69: #{tpu_custom_call.1} parent=55 // pred_check
          %p534 = pneg %p156
        $region70: #{tpu_custom_call.1} parent=55 // pred_check_branch
          %536 = sbr.rel (%p534) target = $region72
        $region71: #{tpu_custom_call.1} parent=55 // pred_region
          %537 = dma.done %s530, 1024
        $region72: #{tpu_custom_call.1} parent=55 // pred_fallthru
          _
        %s538 = sand.u32 %s38, 1
        %s539 = scalar_lea.sflag [#allocation10], %s538
        %s540 = sand.u32 %s169, 1
        %s541 = smul.addr %s540, 16
        %s542 = scalar_lea.vmem [#allocation11], %s541
        // Predicated region
        $region73: #{tpu_custom_call.1} parent=55 // pred_check
          %p543 = pneg %p182
        $region74: #{tpu_custom_call.1} parent=55 // pred_check_branch
          %545 = sbr.rel (%p543) target = $region76
        $region75: #{tpu_custom_call.1} parent=55 // pred_region
          %546 = dma.done %s539, 256
        $region76: #{tpu_custom_call.1} parent=55 // pred_fallthru
          _
        %s547 = sand.u32 %s38, 1
        %s548 = scalar_lea.sflag [#allocation13], %s547
        %s549 = sand.u32 %s195, 1
        %s550 = scalar_lea.vmem [#allocation12], %s549
        // Predicated region
        $region77: #{tpu_custom_call.1} parent=55 // pred_check
          %p551 = pneg %p208
        $region78: #{tpu_custom_call.1} parent=55 // pred_check_branch
          %553 = sbr.rel (%p551) target = $region80
        $region79: #{tpu_custom_call.1} parent=55 // pred_region
          %554 = dma.done %s548, 16
        $region80: #{tpu_custom_call.1} parent=55 // pred_fallthru
          _
        %s555 = sand.u32 %s38, 1
        %s556 = scalar_lea.sflag [#allocation13], %s555
        %s557 = sand.u32 %s221, 1
        %s558 = scalar_lea.vmem [#allocation14], %s557
        // Predicated region
        $region81: #{tpu_custom_call.1} parent=55 // pred_check
          %p559 = pneg %p234
        $region82: #{tpu_custom_call.1} parent=55 // pred_check_branch
          %561 = sbr.rel (%p559) target = $region84
        $region83: #{tpu_custom_call.1} parent=55 // pred_region
          %562 = dma.done %s556, 16
        $region84: #{tpu_custom_call.1} parent=55 // pred_fallthru
          _
        %s563 = sand.u32 %s38, 1
        %s564 = scalar_lea.sflag [#allocation16], %s563
        %s565 = sand.u32 %s247, 1
        %s566 = scalar_lea.vmem [#allocation15], %s565
        // Predicated region
        $region85: #{tpu_custom_call.1} parent=55 // pred_check
          %p567 = pneg %p260
        $region86: #{tpu_custom_call.1} parent=55 // pred_check_branch
          %569 = sbr.rel (%p567) target = $region88
        $region87: #{tpu_custom_call.1} parent=55 // pred_region
          %570 = dma.done %s564, 16
        $region88: #{tpu_custom_call.1} parent=55 // pred_fallthru
          _
        // Predicated region
        $region89: #{tpu_custom_call.1} parent=55 // pred_check
          %p571 = pneg %p281
        $region90: #{tpu_custom_call.1} parent=55 // pred_check_branch
          %573 = sbr.rel (%p571) target = $region92
        $region91: #{tpu_custom_call.1} parent=55 // pred_region
          %574 = dma.done [#allocation16], 16
        $region92: #{tpu_custom_call.1} parent=55 // pred_fallthru
          _
        %s575 = sand.u32 %s65, 1
        %s576 = scalar_lea.sflag [#allocation4], %s575
        %s577 = sand.u32 %s65, 1
        %s578 = smul.addr %s577, 16
        %s579 = scalar_lea.vmem [#allocation3], %s578
        %p580 = pneg %p78
        %p581 = pneg %p75
        %s582 = sand.u32 %s38, 1
        %s583 = scalar_lea.sflag [#allocation7], %s582
        %s584 = sand.u32 %s91, 1
        %s585 = smul.addr %s584, 64
        %s586 = scalar_lea.vmem [#allocation6], %s585
        %p587 = pneg %p104
        %p588 = pneg %p101
        %s589 = sand.u32 %s38, 1
        %s590 = scalar_lea.sflag [#allocation7], %s589
        %s591 = sand.u32 %s117, 1
        %s592 = smul.addr %s591, 64
        %s593 = scalar_lea.vmem [#allocation8], %s592
        %p594 = pneg %p130
        %p595 = pneg %p127
        %s596 = sand.u32 %s38, 1
        %s597 = scalar_lea.sflag [#allocation10], %s596
        %s598 = sand.u32 %s143, 1
        %s599 = smul.addr %s598, 64
        %s600 = scalar_lea.vmem [#allocation9], %s599
        %p601 = pneg %p156
        %p602 = pneg %p153
        %s603 = sand.u32 %s38, 1
        %s604 = scalar_lea.sflag [#allocation10], %s603
        %s605 = sand.u32 %s169, 1
        %s606 = smul.addr %s605, 16
        %s607 = scalar_lea.vmem [#allocation11], %s606
        %p608 = pneg %p182
        %p609 = pneg %p179
        %s610 = sand.u32 %s38, 1
        %s611 = scalar_lea.sflag [#allocation13], %s610
        %s612 = sand.u32 %s195, 1
        %s613 = scalar_lea.vmem [#allocation12], %s612
        %p614 = pneg %p208
        %p615 = pneg %p205
        %s616 = sand.u32 %s38, 1
        %s617 = scalar_lea.sflag [#allocation13], %s616
        %s618 = sand.u32 %s221, 1
        %s619 = scalar_lea.vmem [#allocation14], %s618
        %p620 = pneg %p234
        %p621 = pneg %p231
        %s622 = sand.u32 %s38, 1
        %s623 = scalar_lea.sflag [#allocation16], %s622
        %s624 = sand.u32 %s247, 1
        %s625 = scalar_lea.vmem [#allocation15], %s624
        %p626 = pneg %p260
        %p627 = pneg %p257
        %p628 = pneg %p281
        %p629 = pneg %p278
        %p630 = pneg %p309
        %p631 = pneg %p306
        %s632 = sand.u32 %s296, 1
        %s633 = scalar_lea.sflag [#allocation5], %s632
        %s634 = sand.u32 %s296, 1
        %s635 = smul.addr %s634, 16
        %s636 = scalar_lea.vmem [#allocation18], %s635
        %s637 = smul.u32 2, %s44
        %p639 = scmp.eq.s32.totalorder %s45, 0
        // Predicated region
        $region93: #{tpu_custom_call.1} parent=55 // pred_check
          %p640 = pneg %p639
        $region94: #{tpu_custom_call.1} parent=55 // pred_check_branch
          %642 = sbr.rel (%p640) target = $region96
        $region95: #{tpu_custom_call.1} parent=55 // pred_region
          %643 = vst [vmem:[#allocation2] sm:$0xff] 0.0
          %644 = vst [vmem:[#allocation2 + $0x8] sm:$0xff] 0.0
        $region96: #{tpu_custom_call.1} parent=55 // pred_fallthru
          _
        %v645 = vld [vmem:[%s506] sm:$0xf]
        %v646 = vld [vmem:[%s506 + $0x4] sm:$0xf]
        %v647 = vld [vmem:[%s506 + $0x8] sm:$0xf]
        %v648 = vld [vmem:[%s506 + $0xc] sm:$0xf]
        %s649 = smul.u32 %s44, 16
        %s650 = sshra.s32 %s649, 3
        %s651 = sand.u32 %s649, 7
        %s652 = smul.addr %s650, 4
        %s653 = scalar_lea.vmem %s506, %s652 [#allocation3]
        %v654 = vld [vmem:[%s653] sm:$0xf]
        %v655 = vld [vmem:[%s653 + $0x4] sm:$0xf]
        %v656 = vld [vmem:[%s515] sm:$0xf]
        %v657 = vld [vmem:[%s515 + $0x4] sm:$0xf]
        %v658 = vld [vmem:[%s515 + $0x8] sm:$0xf]
        %v659 = vld [vmem:[%s515 + $0xc] sm:$0xf]
        %v660 = vld [vmem:[%s515 + $0x10] sm:$0xf]
        %v661 = vld [vmem:[%s515 + $0x14] sm:$0xf]
        %v662 = vld [vmem:[%s515 + $0x18] sm:$0xf]
        %v663 = vld [vmem:[%s515 + $0x1c] sm:$0xf]
        %v664 = vld [vmem:[%s515 + $0x20] sm:$0xf]
        %v665 = vld [vmem:[%s515 + $0x24] sm:$0xf]
        %v666 = vld [vmem:[%s515 + $0x28] sm:$0xf]
        %v667 = vld [vmem:[%s515 + $0x2c] sm:$0xf]
        %v668 = vld [vmem:[%s515 + $0x30] sm:$0xf]
        %v669 = vld [vmem:[%s515 + $0x34] sm:$0xf]
        %v670 = vld [vmem:[%s515 + $0x38] sm:$0xf]
        %v671 = vld [vmem:[%s515 + $0x3c] sm:$0xf]
        %v672 = vld [vmem:[%s550] sm:$0x1]
        %v674 = vlaneseq
        %v675 = vshrl.u32 %v674, 7
        %v676 = vsub.s32 0, %v675
        %v677 = vrot.slane %v672, %v676
        %v681 = vunpack.c.l.b16 %v654
        %v682 = vunpack.c.l.b16 %v655
        %v683 = vpack.c.b16 %v682, %v681
        %v701 = vunpack.c.l.b16 %v656
        %v702 = vunpack.c.l.b16 %v657
        %v703 = vunpack.c.l.b16 %v658
        %v704 = vunpack.c.l.b16 %v659
        %v705 = vunpack.c.l.b16 %v660
        %v706 = vunpack.c.l.b16 %v661
        %v707 = vunpack.c.l.b16 %v662
        %v708 = vunpack.c.l.b16 %v663
        %v709 = vunpack.c.l.b16 %v664
        %v710 = vunpack.c.l.b16 %v665
        %v711 = vunpack.c.l.b16 %v666
        %v712 = vunpack.c.l.b16 %v667
        %v713 = vunpack.c.l.b16 %v668
        %v714 = vunpack.c.l.b16 %v669
        %v715 = vunpack.c.l.b16 %v670
        %v716 = vunpack.c.l.b16 %v671
        %v717 = vpack.c.b16 %v702, %v701
        %v718 = vpack.c.b16 %v704, %v703
        %v719 = vpack.c.b16 %v706, %v705
        %v720 = vpack.c.b16 %v708, %v707
        %v721 = vpack.c.b16 %v710, %v709
        %v722 = vpack.c.b16 %v712, %v711
        %v723 = vpack.c.b16 %v714, %v713
        %v724 = vpack.c.b16 %v716, %v715
        %733 = vmatprep.subr.bf16.mxu0 0
        %734 = vmatpush1.bf16.msra.mxu0 %v717
        %735 = vmatprep.subr.bf16.mxu0 0
        %736 = vmatpush1.bf16.msra.mxu0 %v718
        %737 = vmatprep.subr.bf16.mxu0 0
        %738 = vmatpush1.bf16.msra.mxu0 %v719
        %739 = vmatprep.subr.bf16.mxu0 0
        %740 = vmatpush1.bf16.msra.mxu0 %v720
        %741 = vmatprep.subr.bf16.mxu0 0
        %742 = vmatpush1.bf16.msra.mxu0 %v721
        %743 = vmatprep.subr.bf16.mxu0 0
        %744 = vmatpush1.bf16.msra.mxu0 %v722
        %745 = vmatprep.subr.bf16.mxu0 0
        %746 = vmatpush1.bf16.msra.mxu0 %v723
        %747 = vmatprep.subr.bf16.mxu0 0
        %748 = vmatpush1.bf16.msra.mxu0 %v724
        %749 = vmatprep.subr.bf16.mxu0 0
        %750 = vmatpush1.bf16.msra.mxu0 0
        %751 = vmatprep.subr.bf16.mxu0 0
        %752 = vmatpush1.bf16.msra.mxu0 0
        %753 = vmatprep.subr.bf16.mxu0 0
        %754 = vmatpush1.bf16.msra.mxu0 0
        %755 = vmatprep.subr.bf16.mxu0 0
        %756 = vmatpush1.bf16.msra.mxu0 0
        %757 = vmatprep.subr.bf16.mxu0 0
        %758 = vmatpush1.bf16.msra.mxu0 0
        %759 = vmatprep.subr.bf16.mxu0 0
        %760 = vmatpush1.bf16.msra.mxu0 0
        %761 = vmatprep.subr.bf16.mxu0 0
        %762 = vmatpush1.bf16.msra.mxu0 0
        %763 = vmatprep.subr.bf16.mxu0 0
        %764 = vmatpush1.bf16.msra.mxu0 0
        %765 = vmatprep.mubr.bf16.mxu0 0
        %766 = vmatmul.mubr.bf16.gmra.mrb[0].mxu0 %v683
        %v767 = vpop.f32.mrb[0].mxu0
        %v768 = vadd.f32 %v677, %v767
        %v769 = vpop.f32.mrb[0].mxu0
        %v770 = vpop.f32.mrb[0].mxu0
        %v771 = vadd.f32 %v677, %v770
        %v772 = vpop.f32.mrb[0].mxu0
        %773 = vdwg.mxu0
        %v774 = vmul.f32 %v768, 0.17677669
        %v775 = vmul.f32 %v771, 0.17677669
        %v776 = vld [vmem:[%s524] sm:$0xf]
        %v777 = vld [vmem:[%s524 + $0x4] sm:$0xf]
        %v778 = vld [vmem:[%s524 + $0x8] sm:$0xf]
        %v779 = vld [vmem:[%s524 + $0xc] sm:$0xf]
        %v780 = vld [vmem:[%s524 + $0x10] sm:$0xf]
        %v781 = vld [vmem:[%s524 + $0x14] sm:$0xf]
        %v782 = vld [vmem:[%s524 + $0x18] sm:$0xf]
        %v783 = vld [vmem:[%s524 + $0x1c] sm:$0xf]
        %v784 = vld [vmem:[%s524 + $0x20] sm:$0xf]
        %v785 = vld [vmem:[%s524 + $0x24] sm:$0xf]
        %v786 = vld [vmem:[%s524 + $0x28] sm:$0xf]
        %v787 = vld [vmem:[%s524 + $0x2c] sm:$0xf]
        %v788 = vld [vmem:[%s524 + $0x30] sm:$0xf]
        %v789 = vld [vmem:[%s524 + $0x34] sm:$0xf]
        %v790 = vld [vmem:[%s524 + $0x38] sm:$0xf]
        %v791 = vld [vmem:[%s524 + $0x3c] sm:$0xf]
        %v792 = vld [vmem:[%s558] sm:$0x1]
        %v794 = vlaneseq
        %v795 = vshrl.u32 %v794, 7
        %v796 = vsub.s32 0, %v795
        %v797 = vrot.slane %v792, %v796
        %v803 = vunpack.c.l.b16 %v645
        %v804 = vunpack.c.l.b16 %v646
        %v805 = vunpack.c.l.b16 %v647
        %v806 = vunpack.c.l.b16 %v648
        %v807 = vpack.c.b16 %v804, %v803
        %v808 = vpack.c.b16 %v806, %v805
        %v827 = vunpack.c.l.b16 %v776
        %v828 = vunpack.c.l.b16 %v777
        %v829 = vunpack.c.l.b16 %v778
        %v830 = vunpack.c.l.b16 %v779
        %v831 = vunpack.c.l.b16 %v780
        %v832 = vunpack.c.l.b16 %v781
        %v833 = vunpack.c.l.b16 %v782
        %v834 = vunpack.c.l.b16 %v783
        %v835 = vunpack.c.l.b16 %v784
        %v836 = vunpack.c.l.b16 %v785
        %v837 = vunpack.c.l.b16 %v786
        %v838 = vunpack.c.l.b16 %v787
        %v839 = vunpack.c.l.b16 %v788
        %v840 = vunpack.c.l.b16 %v789
        %v841 = vunpack.c.l.b16 %v790
        %v842 = vunpack.c.l.b16 %v791
        %v843 = vpack.c.b16 %v828, %v827
        %v844 = vpack.c.b16 %v830, %v829
        %v845 = vpack.c.b16 %v832, %v831
        %v846 = vpack.c.b16 %v834, %v833
        %v847 = vpack.c.b16 %v836, %v835
        %v848 = vpack.c.b16 %v838, %v837
        %v849 = vpack.c.b16 %v840, %v839
        %v850 = vpack.c.b16 %v842, %v841
        %859 = vmatprep.subr.bf16.mxu0 0
        %860 = vmatpush1.bf16.msra.mxu0 %v843
        %861 = vmatprep.subr.bf16.mxu0 0
        %862 = vmatpush1.bf16.msra.mxu0 %v844
        %863 = vmatprep.subr.bf16.mxu0 0
        %864 = vmatpush1.bf16.msra.mxu0 %v845
        %865 = vmatprep.subr.bf16.mxu0 0
        %866 = vmatpush1.bf16.msra.mxu0 %v846
        %867 = vmatprep.subr.bf16.mxu0 0
        %868 = vmatpush1.bf16.msra.mxu0 %v847
        %869 = vmatprep.subr.bf16.mxu0 0
        %870 = vmatpush1.bf16.msra.mxu0 %v848
        %871 = vmatprep.subr.bf16.mxu0 0
        %872 = vmatpush1.bf16.msra.mxu0 %v849
        %873 = vmatprep.subr.bf16.mxu0 0
        %874 = vmatpush1.bf16.msra.mxu0 %v850
        %875 = vmatprep.subr.bf16.mxu0 0
        %876 = vmatpush1.bf16.msra.mxu0 0
        %877 = vmatprep.subr.bf16.mxu0 0
        %878 = vmatpush1.bf16.msra.mxu0 0
        %879 = vmatprep.subr.bf16.mxu0 0
        %880 = vmatpush1.bf16.msra.mxu0 0
        %881 = vmatprep.subr.bf16.mxu0 0
        %882 = vmatpush1.bf16.msra.mxu0 0
        %883 = vmatprep.subr.bf16.mxu0 0
        %884 = vmatpush1.bf16.msra.mxu0 0
        %885 = vmatprep.subr.bf16.mxu0 0
        %886 = vmatpush1.bf16.msra.mxu0 0
        %887 = vmatprep.subr.bf16.mxu0 0
        %888 = vmatpush1.bf16.msra.mxu0 0
        %889 = vmatprep.subr.bf16.mxu0 0
        %890 = vmatpush1.bf16.msra.mxu0 0
        %891 = vmatprep.mubr.bf16.mxu0 0
        %892 = vmatmul.mubr.bf16.gmra.mrb[0].mxu0 %v807
        %v893 = vpop.f32.mrb[0].mxu0
        %v894 = vadd.f32 %v797, %v893
        %v895 = vpop.f32.mrb[0].mxu0
        %v896 = vpop.f32.mrb[0].mxu0
        %v897 = vadd.f32 %v797, %v896
        %v898 = vpop.f32.mrb[0].mxu0
        %899 = vmatprep.mubr.bf16.mxu0 0
        %900 = vmatmul.mubr.bf16.gmra.mrb[0].mxu0 %v808
        %v901 = vpop.f32.mrb[0].mxu0
        %v902 = vadd.f32 %v797, %v901
        %v903 = vpop.f32.mrb[0].mxu0
        %v904 = vpop.f32.mrb[0].mxu0
        %v905 = vadd.f32 %v797, %v904
        %v906 = vpop.f32.mrb[0].mxu0
        %907 = vdwg.mxu0
        %v908 = vld [vmem:[%s533] sm:$0xf]
        %v909 = vld [vmem:[%s533 + $0x4] sm:$0xf]
        %v910 = vld [vmem:[%s533 + $0x8] sm:$0xf]
        %v911 = vld [vmem:[%s533 + $0xc] sm:$0xf]
        %v912 = vld [vmem:[%s533 + $0x10] sm:$0xf]
        %v913 = vld [vmem:[%s533 + $0x14] sm:$0xf]
        %v914 = vld [vmem:[%s533 + $0x18] sm:$0xf]
        %v915 = vld [vmem:[%s533 + $0x1c] sm:$0xf]
        %v916 = vld [vmem:[%s533 + $0x20] sm:$0xf]
        %v917 = vld [vmem:[%s533 + $0x24] sm:$0xf]
        %v918 = vld [vmem:[%s533 + $0x28] sm:$0xf]
        %v919 = vld [vmem:[%s533 + $0x2c] sm:$0xf]
        %v920 = vld [vmem:[%s533 + $0x30] sm:$0xf]
        %v921 = vld [vmem:[%s533 + $0x34] sm:$0xf]
        %v922 = vld [vmem:[%s533 + $0x38] sm:$0xf]
        %v923 = vld [vmem:[%s533 + $0x3c] sm:$0xf]
        %v924 = vld [vmem:[%s566] sm:$0x1]
        %v926 = vlaneseq
        %v927 = vshrl.u32 %v926, 7
        %v928 = vsub.s32 0, %v927
        %v929 = vrot.slane %v924, %v928
        %v947 = vunpack.c.l.b16 %v908
        %v948 = vunpack.c.l.b16 %v909
        %v949 = vunpack.c.l.b16 %v910
        %v950 = vunpack.c.l.b16 %v911
        %v951 = vunpack.c.l.b16 %v912
        %v952 = vunpack.c.l.b16 %v913
        %v953 = vunpack.c.l.b16 %v914
        %v954 = vunpack.c.l.b16 %v915
        %v955 = vunpack.c.l.b16 %v916
        %v956 = vunpack.c.l.b16 %v917
        %v957 = vunpack.c.l.b16 %v918
        %v958 = vunpack.c.l.b16 %v919
        %v959 = vunpack.c.l.b16 %v920
        %v960 = vunpack.c.l.b16 %v921
        %v961 = vunpack.c.l.b16 %v922
        %v962 = vunpack.c.l.b16 %v923
        %v963 = vpack.c.b16 %v948, %v947
        %v964 = vpack.c.b16 %v950, %v949
        %v965 = vpack.c.b16 %v952, %v951
        %v966 = vpack.c.b16 %v954, %v953
        %v967 = vpack.c.b16 %v956, %v955
        %v968 = vpack.c.b16 %v958, %v957
        %v969 = vpack.c.b16 %v960, %v959
        %v970 = vpack.c.b16 %v962, %v961
        %979 = vmatprep.subr.bf16.mxu0 0
        %980 = vmatpush1.bf16.msra.mxu0 %v963
        %981 = vmatprep.subr.bf16.mxu0 0
        %982 = vmatpush1.bf16.msra.mxu0 %v964
        %983 = vmatprep.subr.bf16.mxu0 0
        %984 = vmatpush1.bf16.msra.mxu0 %v965
        %985 = vmatprep.subr.bf16.mxu0 0
        %986 = vmatpush1.bf16.msra.mxu0 %v966
        %987 = vmatprep.subr.bf16.mxu0 0
        %988 = vmatpush1.bf16.msra.mxu0 %v967
        %989 = vmatprep.subr.bf16.mxu0 0
        %990 = vmatpush1.bf16.msra.mxu0 %v968
        %991 = vmatprep.subr.bf16.mxu0 0
        %992 = vmatpush1.bf16.msra.mxu0 %v969
        %993 = vmatprep.subr.bf16.mxu0 0
        %994 = vmatpush1.bf16.msra.mxu0 %v970
        %995 = vmatprep.subr.bf16.mxu0 0
        %996 = vmatpush1.bf16.msra.mxu0 0
        %997 = vmatprep.subr.bf16.mxu0 0
        %998 = vmatpush1.bf16.msra.mxu0 0
        %999 = vmatprep.subr.bf16.mxu0 0
        %1000 = vmatpush1.bf16.msra.mxu0 0
        %1001 = vmatprep.subr.bf16.mxu0 0
        %1002 = vmatpush1.bf16.msra.mxu0 0
        %1003 = vmatprep.subr.bf16.mxu0 0
        %1004 = vmatpush1.bf16.msra.mxu0 0
        %1005 = vmatprep.subr.bf16.mxu0 0
        %1006 = vmatpush1.bf16.msra.mxu0 0
        %1007 = vmatprep.subr.bf16.mxu0 0
        %1008 = vmatpush1.bf16.msra.mxu0 0
        %1009 = vmatprep.subr.bf16.mxu0 0
        %1010 = vmatpush1.bf16.msra.mxu0 0
        %1011 = vmatprep.mubr.bf16.mxu0 0
        %1012 = vmatmul.mubr.bf16.gmra.mrb[0].mxu0 %v807
        %v1013 = vpop.f32.mrb[0].mxu0
        %v1014 = vadd.f32 %v929, %v1013
        %v1015 = vpop.f32.mrb[0].mxu0
        %v1016 = vpop.f32.mrb[0].mxu0
        %v1017 = vadd.f32 %v929, %v1016
        %v1018 = vpop.f32.mrb[0].mxu0
        %1019 = vmatprep.mubr.bf16.mxu0 0
        %1020 = vmatmul.mubr.bf16.gmra.mrb[0].mxu0 %v808
        %v1021 = vpop.f32.mrb[0].mxu0
        %v1022 = vadd.f32 %v929, %v1021
        %v1023 = vpop.f32.mrb[0].mxu0
        %v1024 = vpop.f32.mrb[0].mxu0
        %v1025 = vadd.f32 %v929, %v1024
        %v1026 = vpop.f32.mrb[0].mxu0
        %1027 = vdwg.mxu0
        %v1028 = vpack.c.bf16 %v775, %v774
        %v1029 = vpack.c.bf16 %v897, %v894
        %v1030 = vpack.c.bf16 %v905, %v902
        %vm1031 = vcmask 261120
        %v1033 = vsel %vm1031, %v1028, 0
        %v1036 = vsel %vm1031, %v1029, 0
        %v1039 = vsel %vm1031, %v1030, 0
        %1041 = vmatprep.subr.bf16.mxu0 0
        %1042 = vmatpush1.bf16.xpose.msra.mxu0 %v1036
        %1043 = vmatprep.subr.bf16.mxu0 0
        %1044 = vmatpush1.bf16.xpose.msra.mxu0 %v1039
        %1045 = vmatprep.subr.bf16.mxu0 0
        %1046 = vmatpush1.bf16.xpose.msra.mxu0 0
        %1047 = vmatprep.subr.bf16.mxu0 0
        %1048 = vmatpush1.bf16.xpose.msra.mxu0 0
        %1049 = vmatprep.subr.bf16.mxu0 0
        %1050 = vmatpush1.bf16.xpose.msra.mxu0 0
        %1051 = vmatprep.subr.bf16.mxu0 0
        %1052 = vmatpush1.bf16.xpose.msra.mxu0 0
        %1053 = vmatprep.subr.bf16.mxu0 0
        %1054 = vmatpush1.bf16.xpose.msra.mxu0 0
        %1055 = vmatprep.subr.bf16.mxu0 0
        %1056 = vmatpush1.bf16.xpose.msra.mxu0 0
        %1057 = vmatprep.subr.bf16.mxu0 0
        %1058 = vmatpush1.bf16.xpose.msra.mxu0 0
        %1059 = vmatprep.subr.bf16.mxu0 0
        %1060 = vmatpush1.bf16.xpose.msra.mxu0 0
        %1061 = vmatprep.subr.bf16.mxu0 0
        %1062 = vmatpush1.bf16.xpose.msra.mxu0 0
        %1063 = vmatprep.subr.bf16.mxu0 0
        %1064 = vmatpush1.bf16.xpose.msra.mxu0 0
        %1065 = vmatprep.subr.bf16.mxu0 0
        %1066 = vmatpush1.bf16.xpose.msra.mxu0 0
        %1067 = vmatprep.subr.bf16.mxu0 0
        %1068 = vmatpush1.bf16.xpose.msra.mxu0 0
        %1069 = vmatprep.subr.bf16.mxu0 0
        %1070 = vmatpush1.bf16.xpose.msra.mxu0 0
        %1071 = vmatprep.subr.bf16.mxu0 0
        %1072 = vmatpush1.bf16.xpose.msra.mxu0 0
        %1073 = vmatprep.mubr.bf16.mxu0 0
        %1074 = vmatmul.mubr.bf16.gmra.mrb[0].mxu0 %v1033
        %v1075 = vpop.f32.mrb[0].mxu0
        %v1076 = vadd.f32 0.0, %v1075
        %v1077 = vpop.f32.mrb[0].mxu0
        %v1078 = vpop.f32.mrb[0].mxu0
        %v1079 = vadd.f32 0.0, %v1078
        %v1080 = vpop.f32.mrb[0].mxu0
        %1081 = vdwg.mxu0
        %v1082 = vlaneseq
        %v1083 = vshrl.u32 %v1082, 7
        %v1084 = vadd.s32 %v1083, 8
        %v1085 = vstv %s649
        %v1086 = vadd.s32 %v1083, %v1085
        %v1087 = vadd.s32 %v1084, %v1085
        %v1088 = vlaneseq
        %v1089 = vand.u32 %v1088, 127
        %vm1090 = vcmp.le.s32.totalorder %v1089, %v1086
        %vm1091 = vcmp.le.s32.totalorder %v1089, %v1087
        %v1092 = vsel %vm1090, %v1076, -1e+09
        %v1093 = vsel %vm1091, %v1079, -1e+09
        %v1094 = vsel %vm1031, %v1092, -inf
        %1095 = vmax.xlane.f32.xlu0 %v1094
        %v1096 = vpop.xlane.xlu0 %1095
        %v1097 = vsel %vm1031, %v1093, -inf
        %1098 = vmax.xlane.f32.xlu0 %v1097
        %v1099 = vpop.xlane.xlu0 %1098
        %v1100 = vsub.f32 %v1092, %v1096
        %v1101 = vsub.f32 %v1093, %v1099
        %v1102 = vmul.f32 %v1100, 1.442695
        %v1103 = vpow.pop %v1102
        %v1104 = vmul.f32 %v1101, 1.442695
        %v1105 = vpow.pop %v1104
        %v1106 = vsel %vm1031, %v1103, 0.0
        %1107 = vadd.xlane.f32.xlu0 %v1106
        %v1108 = vpop.xlane.xlu0 %1107
        %v1109 = vsel %vm1031, %v1105, 0.0
        %1110 = vadd.xlane.f32.xlu0 %v1109
        %v1111 = vpop.xlane.xlu0 %1110
        %v1112 = vrcp.pop %v1108
        %v1113 = vrcp.pop %v1111
        %v1114 = vmul.f32 %v1103, %v1112
        %v1115 = vmul.f32 %v1105, %v1113
        %v1116 = vpack.c.bf16 %v1115, %v1114
        %v1117 = vpack.c.bf16 %v1017, %v1014
        %v1118 = vpack.c.bf16 %v1025, %v1022
        %v1120 = vsel %vm1031, %v1116, 0
        %1122 = vmatprep.subr.bf16.mxu0 0
        %1123 = vmatpush1.bf16.msra.mxu0 %v1117
        %1124 = vmatprep.subr.bf16.mxu0 0
        %1125 = vmatpush1.bf16.msra.mxu0 %v1118
        %1126 = vmatprep.subr.bf16.mxu0 0
        %1127 = vmatpush1.bf16.msra.mxu0 0
        %1128 = vmatprep.subr.bf16.mxu0 0
        %1129 = vmatpush1.bf16.msra.mxu0 0
        %1130 = vmatprep.subr.bf16.mxu0 0
        %1131 = vmatpush1.bf16.msra.mxu0 0
        %1132 = vmatprep.subr.bf16.mxu0 0
        %1133 = vmatpush1.bf16.msra.mxu0 0
        %1134 = vmatprep.subr.bf16.mxu0 0
        %1135 = vmatpush1.bf16.msra.mxu0 0
        %1136 = vmatprep.subr.bf16.mxu0 0
        %1137 = vmatpush1.bf16.msra.mxu0 0
        %1138 = vmatprep.subr.bf16.mxu0 0
        %1139 = vmatpush1.bf16.msra.mxu0 0
        %1140 = vmatprep.subr.bf16.mxu0 0
        %1141 = vmatpush1.bf16.msra.mxu0 0
        %1142 = vmatprep.subr.bf16.mxu0 0
        %1143 = vmatpush1.bf16.msra.mxu0 0
        %1144 = vmatprep.subr.bf16.mxu0 0
        %1145 = vmatpush1.bf16.msra.mxu0 0
        %1146 = vmatprep.subr.bf16.mxu0 0
        %1147 = vmatpush1.bf16.msra.mxu0 0
        %1148 = vmatprep.subr.bf16.mxu0 0
        %1149 = vmatpush1.bf16.msra.mxu0 0
        %1150 = vmatprep.subr.bf16.mxu0 0
        %1151 = vmatpush1.bf16.msra.mxu0 0
        %1152 = vmatprep.subr.bf16.mxu0 0
        %1153 = vmatpush1.bf16.msra.mxu0 0
        %1154 = vmatprep.mubr.bf16.mxu0 0
        %1155 = vmatmul.mubr.bf16.gmra.mrb[0].mxu0 %v1120
        %v1156 = vpop.f32.mrb[0].mxu0
        %v1157 = vadd.f32 0.0, %v1156
        %v1158 = vpop.f32.mrb[0].mxu0
        %v1159 = vpop.f32.mrb[0].mxu0
        %v1160 = vadd.f32 0.0, %v1159
        %v1161 = vpop.f32.mrb[0].mxu0
        %1162 = vdwg.mxu0
        %v1163 = vld [vmem:[#allocation2] sm:$0xff]
        %v1164 = vld [vmem:[#allocation2 + $0x8] sm:$0xff]
        %v1165 = vpack.c.bf16 %v1160, %v1157
        %v1166 = vld [vmem:[%s542] sm:$0xf]
        %v1167 = vld [vmem:[%s542 + $0x4] sm:$0xf]
        %v1168 = vld [vmem:[%s542 + $0x8] sm:$0xf]
        %v1169 = vld [vmem:[%s542 + $0xc] sm:$0xf]
        %v1174 = vunpack.c.l.b16 %v1166
        %v1175 = vunpack.c.l.b16 %v1167
        %v1176 = vunpack.c.l.b16 %v1168
        %v1177 = vunpack.c.l.b16 %v1169
        %v1178 = vpack.c.b16 %v1175, %v1174
        %v1179 = vpack.c.b16 %v1177, %v1176
        %v1183 = vsel %vm1031, %v1165, 0
        %1185 = vmatprep.subr.bf16.mxu0 0
        %1186 = vmatpush1.bf16.msra.mxu0 %v1178
        %1187 = vmatprep.subr.bf16.mxu0 0
        %1188 = vmatpush1.bf16.msra.mxu0 %v1179
        %1189 = vmatprep.subr.bf16.mxu0 0
        %1190 = vmatpush1.bf16.msra.mxu0 0
        %1191 = vmatprep.subr.bf16.mxu0 0
        %1192 = vmatpush1.bf16.msra.mxu0 0
        %1193 = vmatprep.subr.bf16.mxu0 0
        %1194 = vmatpush1.bf16.msra.mxu0 0
        %1195 = vmatprep.subr.bf16.mxu0 0
        %1196 = vmatpush1.bf16.msra.mxu0 0
        %1197 = vmatprep.subr.bf16.mxu0 0
        %1198 = vmatpush1.bf16.msra.mxu0 0
        %1199 = vmatprep.subr.bf16.mxu0 0
        %1200 = vmatpush1.bf16.msra.mxu0 0
        %1201 = vmatprep.subr.bf16.mxu0 0
        %1202 = vmatpush1.bf16.msra.mxu0 0
        %1203 = vmatprep.subr.bf16.mxu0 0
        %1204 = vmatpush1.bf16.msra.mxu0 0
        %1205 = vmatprep.subr.bf16.mxu0 0
        %1206 = vmatpush1.bf16.msra.mxu0 0
        %1207 = vmatprep.subr.bf16.mxu0 0
        %1208 = vmatpush1.bf16.msra.mxu0 0
        %1209 = vmatprep.subr.bf16.mxu0 0
        %1210 = vmatpush1.bf16.msra.mxu0 0
        %1211 = vmatprep.subr.bf16.mxu0 0
        %1212 = vmatpush1.bf16.msra.mxu0 0
        %1213 = vmatprep.subr.bf16.mxu0 0
        %1214 = vmatpush1.bf16.msra.mxu0 0
        %1215 = vmatprep.subr.bf16.mxu0 0
        %1216 = vmatpush1.bf16.msra.mxu0 0
        %1217 = vmatprep.mubr.bf16.mxu0 0
        %1218 = vmatmul.mubr.bf16.gmra.mrb[0].mxu0 %v1183
        %v1219 = vpop.f32.mrb[0].mxu0
        %v1220 = vadd.f32 0.0, %v1219
        %v1221 = vpop.f32.mrb[0].mxu0
        %v1222 = vpop.f32.mrb[0].mxu0
        %v1223 = vadd.f32 0.0, %v1222
        %v1224 = vpop.f32.mrb[0].mxu0
        %1225 = vdwg.mxu0
        %v1226 = vadd.f32 %v1163, %v1220
        %v1227 = vadd.f32 %v1164, %v1223
        %1228 = vst [vmem:[#allocation2] sm:$0xff] %v1226
        %1229 = vst [vmem:[#allocation2 + $0x8] sm:$0xff] %v1227
        %p1230 = scmp.eq.s32.totalorder %s45, 3
        // Predicated region
        $region97: #{tpu_custom_call.1} parent=55 // pred_check
          %p1231 = pneg %p1230
        $region98: #{tpu_custom_call.1} parent=55 // pred_check_branch
          %1233 = sbr.rel (%p1231) target = $region100
        $region99: #{tpu_custom_call.1} parent=55 // pred_region
          %v1234 = vld [vmem:[#allocation2] sm:$0xff]
          %v1235 = vld [vmem:[#allocation2 + $0x8] sm:$0xff]
          %v1236 = vld [vmem:[#allocation17] sm:$0x1]
          %v1238 = vlaneseq
          %v1239 = vshrl.u32 %v1238, 7
          %v1240 = vsub.s32 0, %v1239
          %v1241 = vrot.slane %v1236, %v1240
          %v1243 = vadd.f32 %v1234, %v1241
          %v1244 = vadd.f32 %v1235, %v1241
          %1245 = vst [vmem:[%s636] sm:$0xff] %v1243
          %1246 = vst [vmem:[%s636 + $0x8] sm:$0xff] %v1244
        $region100: #{tpu_custom_call.1} parent=55 // pred_fallthru
          _
        %s1247 = sand.u32 %s296, 1
        %s1248 = scalar_lea.sflag [#allocation5], %s1247
        %s1249 = sand.u32 %s296, 1
        %s1250 = smul.addr %s1249, 16
        %s1251 = scalar_lea.vmem [#allocation18], %s1250
        // Predicated region
        $region101: #{tpu_custom_call.1} parent=55 // pred_check
          %p1252 = pneg %p306
        $region102: #{tpu_custom_call.1} parent=55 // pred_check_branch
          %1254 = sbr.rel (%p1252) target = $region104
        $region103: #{tpu_custom_call.1} parent=55 // pred_region
          %s1255 = smul.u32 2, %s44
          %s1257 = ssub.s32 256, 256
          %1258 = vsyncadd %s1248, %s1257
          %s1259 = smul.addr %s43, 4
          %s1260 = sadd.s32 %s1255, %s1259
          %s1261 = smul.addr %s1260, 128
          %s1262 = scalar_lea.hbm %s9, %s1261
          %s1263 = sshll.u32 %s1251, 4
          %s1264 = int_to_ptr.vmem [resolvable:$true] %s1263
          %1269 = dma.vmem_to_hbm [thread:$0]  %s1264, 256, %s1262, %s1248, 128, 128, 8
        $region104: #{tpu_custom_call.1} parent=55 // pred_fallthru
          _
      $region56: #{tpu_custom_call.1} parent=5 // pred_fallthru
        _
      %p1270 = scmp.le.s32.totalorder 2, %s33
      // Predicated region
      $region105: #{tpu_custom_call.1} parent=5 // pred_check
        %p1271 = pneg %p1270
      $region106: #{tpu_custom_call.1} parent=5 // pred_check_branch
        %1273 = sbr.rel (%p1271) target = $region108
      $region107: #{tpu_custom_call.1} parent=5 // pred_region
        %s1274 = ssub.s32 %s33, 2
        // Predicated region
        $region109: #{tpu_custom_call.1} parent=107 // pred_check
          %p1275 = pneg %p312
        $region110: #{tpu_custom_call.1} parent=107 // pred_check_branch
          %1277 = sbr.rel (%p1275) target = $region112
        $region111: #{tpu_custom_call.1} parent=107 // pred_region
          %s1278 = sand.u32 %s297, 1
          %s1279 = scalar_lea.sflag [#allocation5], %s1278
          %s1280 = sand.u32 %s297, 1
          %s1281 = smul.addr %s1280, 16
          %s1282 = scalar_lea.vmem [#allocation18], %s1281
          %1283 = dma.done %s1279, 256
        $region112: #{tpu_custom_call.1} parent=107 // pred_fallthru
          _
      $region108: #{tpu_custom_call.1} parent=5 // pred_fallthru
        _
    $region6: #{tpu_custom_call.1} parent=1 // loop_footer
      %s37 = sadd.s32 1, %s33
    $region7: #{tpu_custom_call.1} parent=1 // loop_footer_branch
      %32 = sbr.rel target = $region3
    $region8: #{tpu_custom_call.1} parent=1 // loop_exit
      _
    %1284 = vsyncpa [#allocation4], 1
    %s1285 = scalar_lea.sflag [#allocation4], 1
    %1286 = vsyncpa %s1285, 1
    %1287 = vsyncpa [#allocation7], 1
    %s1288 = scalar_lea.sflag [#allocation7], 1
    %1289 = vsyncpa %s1288, 1
    %1290 = vsyncpa [#allocation10], 1
    %s1291 = scalar_lea.sflag [#allocation10], 1
    %1292 = vsyncpa %s1291, 1
    %1293 = vsyncpa [#allocation13], 1
    %s1294 = scalar_lea.sflag [#allocation13], 1
    %1295 = vsyncpa %s1294, 1
    %1296 = vsyncpa [#allocation16], 1
    %s1297 = scalar_lea.sflag [#allocation16], 1
    %1298 = vsyncpa %s1297, 1
    %1299 = vsyncpa [#allocation5], 1
    %s1300 = scalar_lea.sflag [#allocation5], 1
    %1301 = vsyncpa %s1300, 1

</llo_original>
